<compile_context>
chip_gen: v6e
topology: v6e:2x2x1
jax: 0.10.0
libtpu: 0.0.40
codegen_flags: <defaults>
</compile_context>

<pallas_src>
import functools

import jax
import jax.numpy as jnp
from jax import lax
from jax.experimental import pallas as pl
from jax.experimental.pallas import tpu as pltpu


def _compiler_params(grid_len):
    # Explicit VMEM budget (safe on v5e/v6e/v7x); grid axis marked parallel so
    # v7x's two TensorCores can both get work when the grid has >= 2 steps.
    return pltpu.CompilerParams(
        dimension_semantics=("parallel",) * grid_len,
        vmem_limit_bytes=32 * 1024 * 1024,
    )


# ----------------------------------------------------------------------------
# Fused kernel: 5 conv+BN(+ReLU) stages + Scharr + cosine gating + 1x1 fusion
# ----------------------------------------------------------------------------
def _make_unifie_kernel(G, H, W, C):
    WC = W * C
    GH = G * H
    M = 2 * GH                      # rows of the fused rgb+depth slab
    f32 = jnp.float32
    bf16 = jnp.bfloat16

    def kernel(x_ref, wconv_ref, bconv_ref, wseg_ref, wfuse_ref, bfuse_ref,
               o_ref):
        # (2, G, H, WC) -> (2*G*H, WC): rows [0:GH] = rgb, [GH:2GH] = depth.
        x = x_ref[...].reshape(M, WC).astype(f32)

        # Hoisted edge masks (per-image row boundaries / per-pixel lane bounds).
        row_in_img = lax.broadcasted_iota(jnp.int32, (M, WC), 0) % H
        lane_ids = lax.broadcasted_iota(jnp.int32, (M, WC), 1)
        top_mask = row_in_img == 0
        bot_mask = row_in_img == H - 1
        left_mask = lane_ids < C
        right_mask = lane_ids >= (W - 1) * C

        def shift_up(v):    # v[h-1, :] with zero pad (dy = 0 tap)
            return jnp.where(top_mask, 0.0, pltpu.roll(v, shift=1, axis=0))

        def shift_dn(v):    # v[h+1, :] with zero pad (dy = 2 tap)
            return jnp.where(bot_mask, 0.0, pltpu.roll(v, shift=M - 1, axis=0))

        def shift_l(v):     # v[:, x-1] with zero pad (dx = 0 tap)
            return jnp.where(left_mask, 0.0, pltpu.roll(v, shift=C, axis=1))

        def shift_r(v):     # v[:, x+1] with zero pad (dx = 2 tap)
            return jnp.where(right_mask, 0.0,
                             pltpu.roll(v, shift=WC - C, axis=1))

        def conv_bn_relu(up, mid, dn, idx, residual=None):
            # Single K = 3*WC matmul per 3x3 conv stage: dy taps stacked along
            # K, bf16 operands, f32 MXU accumulation, folded-BN bias.
            lhs = jnp.concatenate([up, mid, dn], axis=1).astype(bf16)
            acc = jnp.dot(lhs, wconv_ref[idx], preferred_element_type=f32)
            acc = acc + bconv_ref[idx]
            if residual is not None:
                acc = acc + residual            # added before ReLU
            return jnp.maximum(acc, 0.0)

        def scharr(v, v_up, v_dn):
            # depthwise Scharr magnitude; taps via roll + mask (XLU), f32 VPU.
            lu, ru = shift_l(v_up), shift_r(v_up)
            lm, rm = shift_l(v), shift_r(v)
            ld, rd = shift_l(v_dn), shift_r(v_dn)
            gx = 3.0 * (lu - ru) + 10.0 * (lm - rm) + 3.0 * (ld - rd)
            gy = 3.0 * (lu + ru) + 10.0 * v_up - 3.0 * (ld + rd) - 10.0 * v_dn
            return jnp.sqrt(gx * gx + gy * gy + 1e-6)

        # ---- shared branch pipeline (rgb rows on top, depth rows below) ----
        feats = conv_bn_relu(shift_up(x), x, shift_dn(x), 0)          # CBR
        f_up, f_dn = shift_up(feats), shift_dn(feats)                 # reused

        t = conv_bn_relu(f_up, feats, f_dn, 1)                        # res conv1
        b1 = conv_bn_relu(shift_up(t), t, shift_dn(t), 2, residual=feats)

        attn_in = feats + scharr(feats, f_up, f_dn)                   # curvature
        b2 = conv_bn_relu(shift_up(attn_in), attn_in, shift_dn(attn_in), 3)
        b4 = conv_bn_relu(shift_up(b2), b2, shift_dn(b2), 4)          # refine

        # ---- cosine gating + combine + 1x1 fusion conv ----
        # One segment-sum matmul for dot/|b1|^2/|b2|^2 of BOTH modalities.
        prods = jnp.concatenate([b1 * b2, b1 * b1, b2 * b2], axis=0)  # (3M, WC)
        sums = jnp.dot(prods, wseg_ref[...], preferred_element_type=f32)
        dot12 = sums[0:M]
        n1sq = sums[M:2 * M]
        n2sq = sums[2 * M:3 * M]
        eps = 1e-8
        # PyTorch F.cosine_similarity: w12 / sqrt(clamp(w1*w2, eps^2))
        sim = dot12 * lax.rsqrt(jnp.maximum(n1sq * n2sq, eps * eps))
        combined = b1 * sim + b4                                      # b3 + b4
        pair_sum = combined[0:GH] + combined[GH:2 * GH]               # rgb+depth

        out = jnp.dot(pair_sum.astype(bf16), wfuse_ref[...],
                      preferred_element_type=f32)
        out = out + bfuse_ref[...]
        o_ref[...] = out.reshape(G, H, WC).astype(o_ref.dtype)

    return kernel


def run_unifie_kernel(x_all, params, channels, pairs_per_block):
    _, N, H, WC = x_all.shape
    W = WC // channels
    G = pairs_per_block
    grid = (N // G,)
    return pl.pallas_call(
        _make_unifie_kernel(G, H, W, channels),
        grid=grid,
        in_specs=(
            pl.BlockSpec((2, G, H, WC), lambda p: (0, p, 0, 0)),     # rgb+depth pairs
            pl.BlockSpec((5, 3 * WC, WC), lambda p: (0, 0, 0)),      # banded conv weights (bf16)
            pl.BlockSpec((5, 1, WC), lambda p: (0, 0, 0)),           # folded-BN biases
            pl.BlockSpec((WC, WC), lambda p: (0, 0)),                # segment-sum matrix (f32)
            pl.BlockSpec((WC, WC), lambda p: (0, 0)),                # block-diag 1x1 conv (bf16)
            pl.BlockSpec((1, WC), lambda p: (0, 0)),                 # fusion bias
        ),
        out_specs=pl.BlockSpec((G, H, WC), lambda p: (p, 0, 0)),
        out_shape=jax.ShapeDtypeStruct((N, H, WC), x_all.dtype),
        compiler_params=_compiler_params(len(grid)),
    )(x_all, params["wconv"], params["bconv"], params["wseg"],
      params["wfuse"], params["bfuse"])


# ----------------------------------------------------------------------------
# Parameter setup (deterministic, synthetic); eval-mode BN folded into convs,
# conv weights re-expressed as stacked banded (3*W*C, W*C) matrices.
# ----------------------------------------------------------------------------
def _conv_bn_params(key, channels, eps=1e-5):
    kw, kg, kb, km, kv = jax.random.split(key, 5)
    # PyTorch layout: (Cout, Cin, 3, 3), cross-correlation taps (F.conv2d).
    w = jax.random.normal(kw, (channels, channels, 3, 3), jnp.float32) * 0.1
    gamma = 1.0 + 0.1 * jax.random.normal(kg, (channels,), jnp.float32)
    beta = 0.1 * jax.random.normal(kb, (channels,), jnp.float32)
    mean = 0.1 * jax.random.normal(km, (channels,), jnp.float32)
    var = 0.5 + jax.random.uniform(kv, (channels,), jnp.float32)
    scale = gamma / jnp.sqrt(var + eps)
    w_eff = w * scale[:, None, None, None]
    b_eff = beta - mean * scale
    return w_eff, b_eff


def _band_matrix(w_eff, width):
    """(Cout,Cin,3,3) conv weights -> (3, W*Cin, W*Cout) banded matrices.

    M[dy][w_in*Cin+ci, w_out*Cout+co] = w_eff[co, ci, dy, w_in - w_out + 1]
    (zero outside the 3-wide band), so the dx taps and the W-direction zero
    padding are folded into one lane-dense matmul per dy tap.
    """
    wk = jnp.transpose(w_eff, (2, 3, 1, 0))                  # (dy, dx, Cin, Cout)
    cin, cout = wk.shape[2], wk.shape[3]
    dx = jnp.arange(width)[:, None] - jnp.arange(width)[None, :] + 1
    valid = ((dx >= 0) & (dx <= 2)).astype(w_eff.dtype)
    dx_c = jnp.clip(dx, 0, 2)
    mats = []
    for dy in range(3):
        t = wk[dy][dx_c] * valid[:, :, None, None]           # (Win, Wout, Cin, Cout)
        t = jnp.transpose(t, (0, 2, 1, 3)).reshape(width * cin, width * cout)
        mats.append(t)
    return jnp.stack(mats)                                   # (3, W*Cin, W*Cout)


def init_params(key, channels, width, mxu_dtype=jnp.bfloat16):
    WC = width * channels
    ks = jax.random.split(key, 6)
    wmats, biases = [], []
    for k in ks[:5]:                                 # cbr, res1, res2, curv, ref
        w_eff, b_eff = _conv_bn_params(k, channels)
        band = _band_matrix(w_eff, width)            # (3, WC, WC)
        wmats.append(band.reshape(3 * WC, WC))       # dy taps stacked along K
        biases.append(jnp.tile(b_eff, width)[None, :])
    params = {
        "wconv": jnp.stack(wmats).astype(mxu_dtype),          # (5, 3*WC, WC)
        "bconv": jnp.stack(biases),                           # (5, 1, WC) f32
    }
    kw, kb = jax.random.split(ks[5])
    w1 = jax.random.normal(kw, (channels, channels, 1, 1), jnp.float32) * 0.1
    b1 = 0.1 * jax.random.normal(kb, (channels,), jnp.float32)
    w1_mat = jnp.transpose(w1[:, :, 0, 0], (1, 0))            # (Cin, Cout)
    eye_w = jnp.eye(width, dtype=jnp.float32)
    params["wfuse"] = jnp.kron(eye_w, w1_mat).astype(mxu_dtype)   # block-diag 1x1
    params["bfuse"] = jnp.tile(b1, width)[None, :]                # (1, WC) f32
    params["wseg"] = jnp.kron(eye_w, jnp.ones((channels, channels), jnp.float32))
    return params


# ----------------------------------------------------------------------------
# Forward pass (mirrors Unifie.forward)
# ----------------------------------------------------------------------------
def _pick_pairs_per_block(N, H):
    # Target ~256 matmul rows (2*G*H) per grid step; G must divide N.
    target = max(1, 256 // (2 * H))
    best = 1
    for g in range(1, min(N, target) + 1):
        if N % g == 0:
            best = g
    return best


def unifie_forward(params, rgb_nchw, depth_nchw, pairs_per_block=None):
    N, C, H, W = rgb_nchw.shape
    WC = W * C

    def to_rows(x):                                  # NCHW -> (N, H, W*C)
        return jnp.transpose(x, (0, 2, 3, 1)).reshape(N, H, WC)

    # rgb and depth share all branch weights: stack them so each grid step
    # processes G full rgb/depth pairs in one fused kernel invocation.
    x_all = jnp.stack([to_rows(rgb_nchw), to_rows(depth_nchw)], axis=0)
    if pairs_per_block is None:
        pairs_per_block = _pick_pairs_per_block(N, H)

    # All ops preserve (H, W), so the F.interpolate branches are never taken.
    out_rows = run_unifie_kernel(x_all, params, C, pairs_per_block)
    out = out_rows.reshape(N, H, W, C)
    return jnp.transpose(out, (0, 3, 1, 2))          # -> NCHW


if __name__ == "__main__":
    key = jax.random.PRNGKey(0)
    kp, kr, kd = jax.random.split(key, 3)

    N, C, H, W = 2, 8, 16, 16                        # W*C = 128: lane-dense
    params = init_params(kp, C, W)
    rgb_input = jax.random.normal(kr, (N, C, H, W), jnp.float32)
    depth_input = jax.random.normal(kd, (N, C, H, W), jnp.float32)

    fwd = jax.jit(functools.partial(unifie_forward, params))
    out = fwd(rgb_input, depth_input)
    jax.block_until_ready(out)
    assert out.shape == (N, C, H, W) and out.dtype == jnp.float32
    print("KERNEL_OK")
</pallas_src>

<mosaic_0001>
module attributes {stable_mosaic.version = 11 : i64} {
  func.func @kernel(%arg0: i32, %arg1: memref<2x2x16x128xf32, #tpu.memory_space<vmem>>, %arg2: memref<5x384x128xbf16, #tpu.memory_space<vmem>>, %arg3: memref<5x1x128xf32, #tpu.memory_space<vmem>>, %arg4: memref<128x128xf32, #tpu.memory_space<vmem>>, %arg5: memref<128x128xbf16, #tpu.memory_space<vmem>>, %arg6: memref<1x128xf32, #tpu.memory_space<vmem>>, %arg7: memref<2x16x128xf32, #tpu.memory_space<vmem>>) attributes {dimension_semantics = [#tpu.dimension_semantics<parallel>], iteration_bounds = array<i64: 1>, scalar_prefetch = 0 : i64, scratch_operands = 0 : i64, tpu.core_type = #tpu.core_type<tc>, window_params = [{transform_indices = @transform_0, window_bounds = array<i64: 2, 2, 16, 128>}, {pipeline_mode = #tpu.pipeline_mode<synchronous>, transform_indices = @transform_1, window_bounds = array<i64: 5, 384, 128>}, {pipeline_mode = #tpu.pipeline_mode<synchronous>, transform_indices = @transform_2, window_bounds = array<i64: 5, 1, 128>}, {pipeline_mode = #tpu.pipeline_mode<synchronous>, transform_indices = @transform_3, window_bounds = array<i64: 128, 128>}, {pipeline_mode = #tpu.pipeline_mode<synchronous>, transform_indices = @transform_4, window_bounds = array<i64: 128, 128>}, {pipeline_mode = #tpu.pipeline_mode<synchronous>, transform_indices = @transform_5, window_bounds = array<i64: 1, 128>}, {transform_indices = @transform_6, window_bounds = array<i64: 2, 16, 128>}]} {
    %c0 = arith.constant 0 : index
    %c0_0 = arith.constant 0 : index
    %c0_1 = arith.constant 0 : index
    %c0_2 = arith.constant 0 : index
    %0 = vector.load %arg1[%c0, %c0_0, %c0_1, %c0_2] : memref<2x2x16x128xf32, #tpu.memory_space<vmem>>, vector<2x2x16x128xf32>
    %1 = vector.shape_cast %0 : vector<2x2x16x128xf32> to vector<64x128xf32>
    %2 = tpu.iota {dimensions = array<i32: 0>} : vector<64x128xi32>
    %c16_i32 = arith.constant 16 : i32
    %c0_i32 = arith.constant 0 : i32
    %3 = arith.cmpi eq, %c16_i32, %c0_i32 : i32
    %c1_i32 = arith.constant 1 : i32
    %4 = arith.select %3, %c1_i32, %c16_i32 : i32
    %5 = vector.broadcast %4 : i32 to vector<64x128xi32>
    %6 = arith.remsi %2, %5 : vector<64x128xi32>
    %c0_i32_3 = arith.constant 0 : i32
    %7 = vector.broadcast %c0_i32_3 : i32 to vector<64x128xi32>
    %8 = arith.cmpi ne, %6, %7 : vector<64x128xi32>
    %c0_i32_4 = arith.constant 0 : i32
    %9 = vector.broadcast %c0_i32_4 : i32 to vector<64x128xi32>
    %10 = arith.cmpi slt, %6, %9 : vector<64x128xi32>
    %c0_i32_5 = arith.constant 0 : i32
    %11 = arith.cmpi slt, %4, %c0_i32_5 : i32
    %12 = vector.broadcast %11 : i1 to vector<64x128xi1>
    %13 = vector.broadcast %12 : vector<64x128xi1> to vector<64x128xi1>
    %14 = arith.xori %10, %13 : vector<64x128xi1>
    %15 = arith.andi %14, %8 : vector<64x128xi1>
    %16 = vector.broadcast %4 : i32 to vector<64x128xi32>
    %17 = arith.addi %6, %16 : vector<64x128xi32>
    %18 = arith.select %15, %17, %6 : vector<64x128xi1>, vector<64x128xi32>
    %19 = tpu.iota {dimensions = array<i32: 1>} : vector<64x128xi32>
    %c0_i32_6 = arith.constant 0 : i32
    %20 = vector.broadcast %c0_i32_6 : i32 to vector<64x128xi32>
    %21 = arith.cmpi eq, %18, %20 : vector<64x128xi32>
    %c15_i32 = arith.constant 15 : i32
    %22 = vector.broadcast %c15_i32 : i32 to vector<64x128xi32>
    %23 = arith.cmpi eq, %18, %22 : vector<64x128xi32>
    %c8_i32 = arith.constant 8 : i32
    %24 = vector.broadcast %c8_i32 : i32 to vector<64x128xi32>
    %25 = arith.cmpi slt, %19, %24 : vector<64x128xi32>
    %c120_i32 = arith.constant 120 : i32
    %26 = vector.broadcast %c120_i32 : i32 to vector<64x128xi32>
    %27 = arith.cmpi sge, %19, %26 : vector<64x128xi32>
    %c1_i32_7 = arith.constant 1 : i32
    %28 = tpu.dynamic_rotate %1 by %c1_i32_7 dim 0 : vector<64x128xf32>, i32 -> vector<64x128xf32>
    %cst = arith.constant 0.000000e+00 : f32
    %29 = vector.broadcast %cst : f32 to vector<64x128xf32>
    %30 = arith.select %21, %29, %28 : vector<64x128xi1>, vector<64x128xf32>
    %c63_i32 = arith.constant 63 : i32
    %31 = tpu.dynamic_rotate %1 by %c63_i32 dim 0 : vector<64x128xf32>, i32 -> vector<64x128xf32>
    %cst_8 = arith.constant 0.000000e+00 : f32
    %32 = vector.broadcast %cst_8 : f32 to vector<64x128xf32>
    %33 = arith.select %23, %32, %31 : vector<64x128xi1>, vector<64x128xf32>
    %34 = tpu.concatenate %30, %1, %33 in 1 : vector<64x128xf32>, vector<64x128xf32>, vector<64x128xf32> -> vector<64x384xf32>
    %35 = arith.truncf %34 : vector<64x384xf32> to vector<64x384xbf16>
    %c0_9 = arith.constant 0 : index
    %c0_10 = arith.constant 0 : index
    %c0_11 = arith.constant 0 : index
    %36 = vector.load %arg2[%c0_9, %c0_10, %c0_11] : memref<5x384x128xbf16, #tpu.memory_space<vmem>>, vector<1x384x128xbf16>
    %37 = vector.shape_cast %36 : vector<1x384x128xbf16> to vector<384x128xbf16>
    %cst_12 = arith.constant dense<0.000000e+00> : vector<64x128xf32>
    %38 = tpu.matmul %35, %37, %cst_12 {dimension_numbers = #tpu.dot_dimension_numbers<[1], [0], [0], [1], [0, 0, 1, 1], [], []>} : vector<64x384xbf16>, vector<384x128xbf16>, vector<64x128xf32> -> vector<64x128xf32>
    %c0_13 = arith.constant 0 : index
    %c0_14 = arith.constant 0 : index
    %c0_15 = arith.constant 0 : index
    %39 = vector.load %arg3[%c0_13, %c0_14, %c0_15] : memref<5x1x128xf32, #tpu.memory_space<vmem>>, vector<1x1x128xf32>
    %40 = vector.shape_cast %39 : vector<1x1x128xf32> to vector<1x128xf32>
    %41 = vector.broadcast %40 : vector<1x128xf32> to vector<64x128xf32>
    %42 = arith.addf %38, %41 : vector<64x128xf32>
    %cst_16 = arith.constant 0.000000e+00 : f32
    %43 = vector.broadcast %cst_16 : f32 to vector<64x128xf32>
    %44 = arith.maximumf %42, %43 : vector<64x128xf32>
    %c1_i32_17 = arith.constant 1 : i32
    %45 = tpu.dynamic_rotate %44 by %c1_i32_17 dim 0 : vector<64x128xf32>, i32 -> vector<64x128xf32>
    %cst_18 = arith.constant 0.000000e+00 : f32
    %46 = vector.broadcast %cst_18 : f32 to vector<64x128xf32>
    %47 = arith.select %21, %46, %45 : vector<64x128xi1>, vector<64x128xf32>
    %c63_i32_19 = arith.constant 63 : i32
    %48 = tpu.dynamic_rotate %44 by %c63_i32_19 dim 0 : vector<64x128xf32>, i32 -> vector<64x128xf32>
    %cst_20 = arith.constant 0.000000e+00 : f32
    %49 = vector.broadcast %cst_20 : f32 to vector<64x128xf32>
    %50 = arith.select %23, %49, %48 : vector<64x128xi1>, vector<64x128xf32>
    %51 = tpu.concatenate %47, %44, %50 in 1 : vector<64x128xf32>, vector<64x128xf32>, vector<64x128xf32> -> vector<64x384xf32>
    %52 = arith.truncf %51 : vector<64x384xf32> to vector<64x384xbf16>
    %c1 = arith.constant 1 : index
    %c0_21 = arith.constant 0 : index
    %c0_22 = arith.constant 0 : index
    %53 = vector.load %arg2[%c1, %c0_21, %c0_22] : memref<5x384x128xbf16, #tpu.memory_space<vmem>>, vector<1x384x128xbf16>
    %54 = vector.shape_cast %53 : vector<1x384x128xbf16> to vector<384x128xbf16>
    %cst_23 = arith.constant dense<0.000000e+00> : vector<64x128xf32>
    %55 = tpu.matmul %52, %54, %cst_23 {dimension_numbers = #tpu.dot_dimension_numbers<[1], [0], [0], [1], [0, 0, 1, 1], [], []>} : vector<64x384xbf16>, vector<384x128xbf16>, vector<64x128xf32> -> vector<64x128xf32>
    %c1_24 = arith.constant 1 : index
    %c0_25 = arith.constant 0 : index
    %c0_26 = arith.constant 0 : index
    %56 = vector.load %arg3[%c1_24, %c0_25, %c0_26] : memref<5x1x128xf32, #tpu.memory_space<vmem>>, vector<1x1x128xf32>
    %57 = vector.shape_cast %56 : vector<1x1x128xf32> to vector<1x128xf32>
    %58 = vector.broadcast %57 : vector<1x128xf32> to vector<64x128xf32>
    %59 = arith.addf %55, %58 : vector<64x128xf32>
    %cst_27 = arith.constant 0.000000e+00 : f32
    %60 = vector.broadcast %cst_27 : f32 to vector<64x128xf32>
    %61 = arith.maximumf %59, %60 : vector<64x128xf32>
    %c1_i32_28 = arith.constant 1 : i32
    %62 = tpu.dynamic_rotate %61 by %c1_i32_28 dim 0 : vector<64x128xf32>, i32 -> vector<64x128xf32>
    %cst_29 = arith.constant 0.000000e+00 : f32
    %63 = vector.broadcast %cst_29 : f32 to vector<64x128xf32>
    %64 = arith.select %21, %63, %62 : vector<64x128xi1>, vector<64x128xf32>
    %c63_i32_30 = arith.constant 63 : i32
    %65 = tpu.dynamic_rotate %61 by %c63_i32_30 dim 0 : vector<64x128xf32>, i32 -> vector<64x128xf32>
    %cst_31 = arith.constant 0.000000e+00 : f32
    %66 = vector.broadcast %cst_31 : f32 to vector<64x128xf32>
    %67 = arith.select %23, %66, %65 : vector<64x128xi1>, vector<64x128xf32>
    %68 = tpu.concatenate %64, %61, %67 in 1 : vector<64x128xf32>, vector<64x128xf32>, vector<64x128xf32> -> vector<64x384xf32>
    %69 = arith.truncf %68 : vector<64x384xf32> to vector<64x384xbf16>
    %c2 = arith.constant 2 : index
    %c0_32 = arith.constant 0 : index
    %c0_33 = arith.constant 0 : index
    %70 = vector.load %arg2[%c2, %c0_32, %c0_33] : memref<5x384x128xbf16, #tpu.memory_space<vmem>>, vector<1x384x128xbf16>
    %71 = vector.shape_cast %70 : vector<1x384x128xbf16> to vector<384x128xbf16>
    %cst_34 = arith.constant dense<0.000000e+00> : vector<64x128xf32>
    %72 = tpu.matmul %69, %71, %cst_34 {dimension_numbers = #tpu.dot_dimension_numbers<[1], [0], [0], [1], [0, 0, 1, 1], [], []>} : vector<64x384xbf16>, vector<384x128xbf16>, vector<64x128xf32> -> vector<64x128xf32>
    %c2_35 = arith.constant 2 : index
    %c0_36 = arith.constant 0 : index
    %c0_37 = arith.constant 0 : index
    %73 = vector.load %arg3[%c2_35, %c0_36, %c0_37] : memref<5x1x128xf32, #tpu.memory_space<vmem>>, vector<1x1x128xf32>
    %74 = vector.shape_cast %73 : vector<1x1x128xf32> to vector<1x128xf32>
    %75 = vector.broadcast %74 : vector<1x128xf32> to vector<64x128xf32>
    %76 = arith.addf %72, %75 : vector<64x128xf32>
    %77 = arith.addf %76, %44 : vector<64x128xf32>
    %cst_38 = arith.constant 0.000000e+00 : f32
    %78 = vector.broadcast %cst_38 : f32 to vector<64x128xf32>
    %79 = arith.maximumf %77, %78 : vector<64x128xf32>
    %c8_i32_39 = arith.constant 8 : i32
    %80 = tpu.dynamic_rotate %47 by %c8_i32_39 dim 1 : vector<64x128xf32>, i32 -> vector<64x128xf32>
    %cst_40 = arith.constant 0.000000e+00 : f32
    %81 = vector.broadcast %cst_40 : f32 to vector<64x128xf32>
    %82 = arith.select %25, %81, %80 : vector<64x128xi1>, vector<64x128xf32>
    %c120_i32_41 = arith.constant 120 : i32
    %83 = tpu.dynamic_rotate %47 by %c120_i32_41 dim 1 : vector<64x128xf32>, i32 -> vector<64x128xf32>
    %cst_42 = arith.constant 0.000000e+00 : f32
    %84 = vector.broadcast %cst_42 : f32 to vector<64x128xf32>
    %85 = arith.select %27, %84, %83 : vector<64x128xi1>, vector<64x128xf32>
    %c8_i32_43 = arith.constant 8 : i32
    %86 = tpu.dynamic_rotate %44 by %c8_i32_43 dim 1 : vector<64x128xf32>, i32 -> vector<64x128xf32>
    %cst_44 = arith.constant 0.000000e+00 : f32
    %87 = vector.broadcast %cst_44 : f32 to vector<64x128xf32>
    %88 = arith.select %25, %87, %86 : vector<64x128xi1>, vector<64x128xf32>
    %c120_i32_45 = arith.constant 120 : i32
    %89 = tpu.dynamic_rotate %44 by %c120_i32_45 dim 1 : vector<64x128xf32>, i32 -> vector<64x128xf32>
    %cst_46 = arith.constant 0.000000e+00 : f32
    %90 = vector.broadcast %cst_46 : f32 to vector<64x128xf32>
    %91 = arith.select %27, %90, %89 : vector<64x128xi1>, vector<64x128xf32>
    %c8_i32_47 = arith.constant 8 : i32
    %92 = tpu.dynamic_rotate %50 by %c8_i32_47 dim 1 : vector<64x128xf32>, i32 -> vector<64x128xf32>
    %cst_48 = arith.constant 0.000000e+00 : f32
    %93 = vector.broadcast %cst_48 : f32 to vector<64x128xf32>
    %94 = arith.select %25, %93, %92 : vector<64x128xi1>, vector<64x128xf32>
    %c120_i32_49 = arith.constant 120 : i32
    %95 = tpu.dynamic_rotate %50 by %c120_i32_49 dim 1 : vector<64x128xf32>, i32 -> vector<64x128xf32>
    %cst_50 = arith.constant 0.000000e+00 : f32
    %96 = vector.broadcast %cst_50 : f32 to vector<64x128xf32>
    %97 = arith.select %27, %96, %95 : vector<64x128xi1>, vector<64x128xf32>
    %98 = arith.subf %82, %85 : vector<64x128xf32>
    %cst_51 = arith.constant 3.000000e+00 : f32
    %99 = vector.broadcast %cst_51 : f32 to vector<64x128xf32>
    %100 = arith.mulf %99, %98 : vector<64x128xf32>
    %101 = arith.subf %88, %91 : vector<64x128xf32>
    %cst_52 = arith.constant 1.000000e+01 : f32
    %102 = vector.broadcast %cst_52 : f32 to vector<64x128xf32>
    %103 = arith.mulf %102, %101 : vector<64x128xf32>
    %104 = arith.addf %100, %103 : vector<64x128xf32>
    %105 = arith.subf %94, %97 : vector<64x128xf32>
    %cst_53 = arith.constant 3.000000e+00 : f32
    %106 = vector.broadcast %cst_53 : f32 to vector<64x128xf32>
    %107 = arith.mulf %106, %105 : vector<64x128xf32>
    %108 = arith.addf %104, %107 : vector<64x128xf32>
    %109 = arith.addf %82, %85 : vector<64x128xf32>
    %cst_54 = arith.constant 3.000000e+00 : f32
    %110 = vector.broadcast %cst_54 : f32 to vector<64x128xf32>
    %111 = arith.mulf %110, %109 : vector<64x128xf32>
    %cst_55 = arith.constant 1.000000e+01 : f32
    %112 = vector.broadcast %cst_55 : f32 to vector<64x128xf32>
    %113 = arith.mulf %112, %47 : vector<64x128xf32>
    %114 = arith.addf %111, %113 : vector<64x128xf32>
    %115 = arith.addf %94, %97 : vector<64x128xf32>
    %cst_56 = arith.constant 3.000000e+00 : f32
    %116 = vector.broadcast %cst_56 : f32 to vector<64x128xf32>
    %117 = arith.mulf %116, %115 : vector<64x128xf32>
    %118 = arith.subf %114, %117 : vector<64x128xf32>
    %cst_57 = arith.constant 1.000000e+01 : f32
    %119 = vector.broadcast %cst_57 : f32 to vector<64x128xf32>
    %120 = arith.mulf %119, %50 : vector<64x128xf32>
    %121 = arith.subf %118, %120 : vector<64x128xf32>
    %122 = arith.mulf %108, %108 : vector<64x128xf32>
    %123 = arith.mulf %121, %121 : vector<64x128xf32>
    %124 = arith.addf %122, %123 : vector<64x128xf32>
    %cst_58 = arith.constant 9.99999997E-7 : f32
    %125 = vector.broadcast %cst_58 : f32 to vector<64x128xf32>
    %126 = arith.addf %124, %125 : vector<64x128xf32>
    %127 = math.sqrt %126 : vector<64x128xf32>
    %128 = arith.addf %44, %127 : vector<64x128xf32>
    %c1_i32_59 = arith.constant 1 : i32
    %129 = tpu.dynamic_rotate %128 by %c1_i32_59 dim 0 : vector<64x128xf32>, i32 -> vector<64x128xf32>
    %cst_60 = arith.constant 0.000000e+00 : f32
    %130 = vector.broadcast %cst_60 : f32 to vector<64x128xf32>
    %131 = arith.select %21, %130, %129 : vector<64x128xi1>, vector<64x128xf32>
    %c63_i32_61 = arith.constant 63 : i32
    %132 = tpu.dynamic_rotate %128 by %c63_i32_61 dim 0 : vector<64x128xf32>, i32 -> vector<64x128xf32>
    %cst_62 = arith.constant 0.000000e+00 : f32
    %133 = vector.broadcast %cst_62 : f32 to vector<64x128xf32>
    %134 = arith.select %23, %133, %132 : vector<64x128xi1>, vector<64x128xf32>
    %135 = tpu.concatenate %131, %128, %134 in 1 : vector<64x128xf32>, vector<64x128xf32>, vector<64x128xf32> -> vector<64x384xf32>
    %136 = arith.truncf %135 : vector<64x384xf32> to vector<64x384xbf16>
    %c3 = arith.constant 3 : index
    %c0_63 = arith.constant 0 : index
    %c0_64 = arith.constant 0 : index
    %137 = vector.load %arg2[%c3, %c0_63, %c0_64] : memref<5x384x128xbf16, #tpu.memory_space<vmem>>, vector<1x384x128xbf16>
    %138 = vector.shape_cast %137 : vector<1x384x128xbf16> to vector<384x128xbf16>
    %cst_65 = arith.constant dense<0.000000e+00> : vector<64x128xf32>
    %139 = tpu.matmul %136, %138, %cst_65 {dimension_numbers = #tpu.dot_dimension_numbers<[1], [0], [0], [1], [0, 0, 1, 1], [], []>} : vector<64x384xbf16>, vector<384x128xbf16>, vector<64x128xf32> -> vector<64x128xf32>
    %c3_66 = arith.constant 3 : index
    %c0_67 = arith.constant 0 : index
    %c0_68 = arith.constant 0 : index
    %140 = vector.load %arg3[%c3_66, %c0_67, %c0_68] : memref<5x1x128xf32, #tpu.memory_space<vmem>>, vector<1x1x128xf32>
    %141 = vector.shape_cast %140 : vector<1x1x128xf32> to vector<1x128xf32>
    %142 = vector.broadcast %141 : vector<1x128xf32> to vector<64x128xf32>
    %143 = arith.addf %139, %142 : vector<64x128xf32>
    %cst_69 = arith.constant 0.000000e+00 : f32
    %144 = vector.broadcast %cst_69 : f32 to vector<64x128xf32>
    %145 = arith.maximumf %143, %144 : vector<64x128xf32>
    %c1_i32_70 = arith.constant 1 : i32
    %146 = tpu.dynamic_rotate %145 by %c1_i32_70 dim 0 : vector<64x128xf32>, i32 -> vector<64x128xf32>
    %cst_71 = arith.constant 0.000000e+00 : f32
    %147 = vector.broadcast %cst_71 : f32 to vector<64x128xf32>
    %148 = arith.select %21, %147, %146 : vector<64x128xi1>, vector<64x128xf32>
    %c63_i32_72 = arith.constant 63 : i32
    %149 = tpu.dynamic_rotate %145 by %c63_i32_72 dim 0 : vector<64x128xf32>, i32 -> vector<64x128xf32>
    %cst_73 = arith.constant 0.000000e+00 : f32
    %150 = vector.broadcast %cst_73 : f32 to vector<64x128xf32>
    %151 = arith.select %23, %150, %149 : vector<64x128xi1>, vector<64x128xf32>
    %152 = tpu.concatenate %148, %145, %151 in 1 : vector<64x128xf32>, vector<64x128xf32>, vector<64x128xf32> -> vector<64x384xf32>
    %153 = arith.truncf %152 : vector<64x384xf32> to vector<64x384xbf16>
    %c4 = arith.constant 4 : index
    %c0_74 = arith.constant 0 : index
    %c0_75 = arith.constant 0 : index
    %154 = vector.load %arg2[%c4, %c0_74, %c0_75] : memref<5x384x128xbf16, #tpu.memory_space<vmem>>, vector<1x384x128xbf16>
    %155 = vector.shape_cast %154 : vector<1x384x128xbf16> to vector<384x128xbf16>
    %cst_76 = arith.constant dense<0.000000e+00> : vector<64x128xf32>
    %156 = tpu.matmul %153, %155, %cst_76 {dimension_numbers = #tpu.dot_dimension_numbers<[1], [0], [0], [1], [0, 0, 1, 1], [], []>} : vector<64x384xbf16>, vector<384x128xbf16>, vector<64x128xf32> -> vector<64x128xf32>
    %c4_77 = arith.constant 4 : index
    %c0_78 = arith.constant 0 : index
    %c0_79 = arith.constant 0 : index
    %157 = vector.load %arg3[%c4_77, %c0_78, %c0_79] : memref<5x1x128xf32, #tpu.memory_space<vmem>>, vector<1x1x128xf32>
    %158 = vector.shape_cast %157 : vector<1x1x128xf32> to vector<1x128xf32>
    %159 = vector.broadcast %158 : vector<1x128xf32> to vector<64x128xf32>
    %160 = arith.addf %156, %159 : vector<64x128xf32>
    %cst_80 = arith.constant 0.000000e+00 : f32
    %161 = vector.broadcast %cst_80 : f32 to vector<64x128xf32>
    %162 = arith.maximumf %160, %161 : vector<64x128xf32>
    %163 = arith.mulf %79, %145 : vector<64x128xf32>
    %164 = arith.mulf %79, %79 : vector<64x128xf32>
    %165 = arith.mulf %145, %145 : vector<64x128xf32>
    %166 = tpu.concatenate %163, %164, %165 in 0 : vector<64x128xf32>, vector<64x128xf32>, vector<64x128xf32> -> vector<192x128xf32>
    %c0_81 = arith.constant 0 : index
    %c0_82 = arith.constant 0 : index
    %167 = vector.load %arg4[%c0_81, %c0_82] : memref<128x128xf32, #tpu.memory_space<vmem>>, vector<128x128xf32>
    %cst_83 = arith.constant dense<0.000000e+00> : vector<192x128xf32>
    %168 = tpu.matmul %166, %167, %cst_83 {dimension_numbers = #tpu.dot_dimension_numbers<[1], [0], [0], [1], [0, 0, 1, 1], [], []>} : vector<192x128xf32>, vector<128x128xf32>, vector<192x128xf32> -> vector<192x128xf32>
    %169 = vector.extract_strided_slice %168 {offsets = [0, 0], sizes = [64, 128], strides = [1, 1]} : vector<192x128xf32> to vector<64x128xf32>
    %170 = vector.extract_strided_slice %168 {offsets = [64, 0], sizes = [64, 128], strides = [1, 1]} : vector<192x128xf32> to vector<64x128xf32>
    %171 = vector.extract_strided_slice %168 {offsets = [128, 0], sizes = [64, 128], strides = [1, 1]} : vector<192x128xf32> to vector<64x128xf32>
    %172 = arith.mulf %170, %171 : vector<64x128xf32>
    %cst_84 = arith.constant 1.000000e-16 : f32
    %173 = vector.broadcast %cst_84 : f32 to vector<64x128xf32>
    %174 = arith.maximumf %172, %173 : vector<64x128xf32>
    %175 = math.rsqrt %174 : vector<64x128xf32>
    %176 = arith.mulf %169, %175 : vector<64x128xf32>
    %177 = arith.mulf %79, %176 : vector<64x128xf32>
    %178 = arith.addf %177, %162 : vector<64x128xf32>
    %179 = vector.extract_strided_slice %178 {offsets = [0, 0], sizes = [32, 128], strides = [1, 1]} : vector<64x128xf32> to vector<32x128xf32>
    %180 = vector.extract_strided_slice %178 {offsets = [32, 0], sizes = [32, 128], strides = [1, 1]} : vector<64x128xf32> to vector<32x128xf32>
    %181 = arith.addf %179, %180 : vector<32x128xf32>
    %182 = arith.truncf %181 : vector<32x128xf32> to vector<32x128xbf16>
    %c0_85 = arith.constant 0 : index
    %c0_86 = arith.constant 0 : index
    %183 = vector.load %arg5[%c0_85, %c0_86] : memref<128x128xbf16, #tpu.memory_space<vmem>>, vector<128x128xbf16>
    %cst_87 = arith.constant dense<0.000000e+00> : vector<32x128xf32>
    %184 = tpu.matmul %182, %183, %cst_87 {dimension_numbers = #tpu.dot_dimension_numbers<[1], [0], [0], [1], [0, 0, 1, 1], [], []>} : vector<32x128xbf16>, vector<128x128xbf16>, vector<32x128xf32> -> vector<32x128xf32>
    %c0_88 = arith.constant 0 : index
    %c0_89 = arith.constant 0 : index
    %185 = vector.load %arg6[%c0_88, %c0_89] : memref<1x128xf32, #tpu.memory_space<vmem>>, vector<1x128xf32>
    %186 = vector.broadcast %185 : vector<1x128xf32> to vector<32x128xf32>
    %187 = arith.addf %184, %186 : vector<32x128xf32>
    %188 = vector.shape_cast %187 : vector<32x128xf32> to vector<2x16x128xf32>
    %c0_90 = arith.constant 0 : index
    %c0_91 = arith.constant 0 : index
    %c0_92 = arith.constant 0 : index
    %189 = vector.load %arg7[%c0_90, %c0_91, %c0_92] : memref<2x16x128xf32, #tpu.memory_space<vmem>>, vector<2x16x128xf32>
    tpu.vector_store %arg7[%c0_90, %c0_91, %c0_92], %188 {strides = array<i32>} : memref<2x16x128xf32, #tpu.memory_space<vmem>>, vector<2x16x128xf32>,
    return
  }
  func.func @transform_0(%arg0: i32) -> (i32, i32, i32, i32) {
    %c0_i32 = arith.constant 0 : i32
    %c0_i32_0 = arith.constant 0 : i32
    %c0_i32_1 = arith.constant 0 : i32
    %c0_i32_2 = arith.constant 0 : i32
    return %c0_i32, %arg0, %c0_i32_0, %c0_i32_1 : i32, i32, i32, i32
  }
  func.func @transform_1(%arg0: i32) -> (i32, i32, i32) {
    %c0_i32 = arith.constant 0 : i32
    %c0_i32_0 = arith.constant 0 : i32
    %c0_i32_1 = arith.constant 0 : i32
    %c0_i32_2 = arith.constant 0 : i32
    return %c0_i32, %c0_i32_0, %c0_i32_1 : i32, i32, i32
  }
  func.func @transform_2(%arg0: i32) -> (i32, i32, i32) {
    %c0_i32 = arith.constant 0 : i32
    %c0_i32_0 = arith.constant 0 : i32
    %c0_i32_1 = arith.constant 0 : i32
    %c0_i32_2 = arith.constant 0 : i32
    return %c0_i32, %c0_i32_0, %c0_i32_1 : i32, i32, i32
  }
  func.func @transform_3(%arg0: i32) -> (i32, i32) {
    %c0_i32 = arith.constant 0 : i32
    %c0_i32_0 = arith.constant 0 : i32
    %c0_i32_1 = arith.constant 0 : i32
    return %c0_i32, %c0_i32_0 : i32, i32
  }
  func.func @transform_4(%arg0: i32) -> (i32, i32) {
    %c0_i32 = arith.constant 0 : i32
    %c0_i32_0 = arith.constant 0 : i32
    %c0_i32_1 = arith.constant 0 : i32
    return %c0_i32, %c0_i32_0 : i32, i32
  }
  func.func @transform_5(%arg0: i32) -> (i32, i32) {
    %c0_i32 = arith.constant 0 : i32
    %c0_i32_0 = arith.constant 0 : i32
    %c0_i32_1 = arith.constant 0 : i32
    return %c0_i32, %c0_i32_0 : i32, i32
  }
  func.func @transform_6(%arg0: i32) -> (i32, i32, i32) {
    %c0_i32 = arith.constant 0 : i32
    %c0_i32_0 = arith.constant 0 : i32
    %c0_i32_1 = arith.constant 0 : i32
    return %arg0, %c0_i32, %c0_i32_0 : i32, i32, i32
  }
}

</mosaic_0001>

<llo_original>
// kernel: unifie_forward.1
$region0: #{unifie_forward.1}
  #allocation0 [shape = 'u32[]', space=smem, size = 0x4, offset = 0x4, fixed_abs, tag = 'smem constant byte address 0x4 - core index']
  #allocation1 [shape = 'u32[144,128]{1,0:T(1,128)}', space=vmem, size = 0x12000, scoped, tag = 'internal scratch']
  %s0 = inlined_call_operand.vmem [shape: f32[2,2,16,128], index: 0, kind: input, shape index: {}]
  %s1 = inlined_call_operand.vmem [shape: bf16[5,384,128], index: 1, kind: input, shape index: {}]
  %s2 = inlined_call_operand.vmem [shape: f32[5,1,128], index: 2, kind: input, shape index: {}]
  %s3 = inlined_call_operand.vmem [shape: f32[128,128], index: 3, kind: input, shape index: {}]
  %s4 = inlined_call_operand.vmem [shape: bf16[128,128], index: 4, kind: input, shape index: {}]
  %s5 = inlined_call_operand.vmem [shape: f32[1,128], index: 5, kind: input, shape index: {}]
  %s6 = inlined_call_operand.vmem [shape: f32[2,16,128], index: 6, kind: output, shape index: {}]
  %s7 = sld [smem:[#allocation0]]
  $region34: #{unifie_forward.1} parent=0
    _
  %s9 = ssub.s32 1, %s7
  %s10 = scalar_select 0, %s9, %s7
  // Predicated region
  $region2: #{unifie_forward.1} parent=0 // pred_check
    _
  $region3: #{unifie_forward.1} parent=0 // pred_check_branch
    %12 = sbr.rel (0) target = $region5
  $region4: #{unifie_forward.1} parent=0 // pred_region
    _
  $region5: #{unifie_forward.1} parent=0 // pred_fallthru
    _
  // Predicated region
  $region6: #{unifie_forward.1} parent=0 // pred_check
    _
  $region7: #{unifie_forward.1} parent=0 // pred_check_branch
    %14 = sbr.rel (0) target = $region9
  $region8: #{unifie_forward.1} parent=0 // pred_region
    _
  $region9: #{unifie_forward.1} parent=0 // pred_fallthru
    _
  // Predicated region
  $region10: #{unifie_forward.1} parent=0 // pred_check
    _
  $region11: #{unifie_forward.1} parent=0 // pred_check_branch
    %16 = sbr.rel (0) target = $region13
  $region12: #{unifie_forward.1} parent=0 // pred_region
    _
  $region13: #{unifie_forward.1} parent=0 // pred_fallthru
    _
  // Predicated region
  $region14: #{unifie_forward.1} parent=0 // pred_check
    _
  $region15: #{unifie_forward.1} parent=0 // pred_check_branch
    %18 = sbr.rel (0) target = $region17
  $region16: #{unifie_forward.1} parent=0 // pred_region
    _
  $region17: #{unifie_forward.1} parent=0 // pred_fallthru
    _
  // Predicated region
  $region18: #{unifie_forward.1} parent=0 // pred_check
    _
  $region19: #{unifie_forward.1} parent=0 // pred_check_branch
    %20 = sbr.rel (0) target = $region21
  $region20: #{unifie_forward.1} parent=0 // pred_region
    _
  $region21: #{unifie_forward.1} parent=0 // pred_fallthru
    _
  // Predicated region
  $region22: #{unifie_forward.1} parent=0 // pred_check
    _
  $region23: #{unifie_forward.1} parent=0 // pred_check_branch
    %22 = sbr.rel (0) target = $region25
  $region24: #{unifie_forward.1} parent=0 // pred_region
    _
  $region25: #{unifie_forward.1} parent=0 // pred_fallthru
    _
  %v24 = vld [vmem:[%s0] sm:$0xff]
  %v25 = vld [vmem:[%s0 + $0x8] sm:$0xff]
  %v26 = vld [vmem:[%s0 + $0x10] sm:$0xff]
  %v27 = vld [vmem:[%s0 + $0x18] sm:$0xff]
  %v28 = vld [vmem:[%s0 + $0x20] sm:$0xff]
  %v29 = vld [vmem:[%s0 + $0x28] sm:$0xff]
  %v30 = vld [vmem:[%s0 + $0x30] sm:$0xff]
  %v31 = vld [vmem:[%s0 + $0x38] sm:$0xff]
  %v32 = vlaneseq
  %v33 = vshrl.u32 %v32, 7
  %v34 = vadd.s32 %v33, 8
  %v35 = vadd.s32 %v33, 16
  %v36 = vadd.s32 %v33, 24
  %v37 = vadd.s32 %v33, 32
  %v38 = vadd.s32 %v33, 40
  %v39 = vadd.s32 %v33, 48
  %v40 = vadd.s32 %v33, 56
  %vm41 = vcmp.lt.s32.totalorder %v33, 0
  %v42 = vsub.s32 0, %v33
  %v43 = vsel %vm41, %v42, %v33
  %v44 = vshrl.u32 %v43, 4
  %v45 = vand.u32 %v43, 15
  %v46 = vsub.s32 0, %v45
  %v47 = vsel %vm41, %v46, %v45
  %vm48 = vcmp.lt.s32.totalorder %v34, 0
  %v49 = vsub.s32 0, %v34
  %v50 = vsel %vm48, %v49, %v34
  %v51 = vshrl.u32 %v50, 4
  %v52 = vand.u32 %v50, 15
  %v53 = vsub.s32 0, %v52
  %v54 = vsel %vm48, %v53, %v52
  %vm55 = vcmp.lt.s32.totalorder %v35, 0
  %v56 = vsub.s32 0, %v35
  %v57 = vsel %vm55, %v56, %v35
  %v58 = vshrl.u32 %v57, 4
  %v59 = vand.u32 %v57, 15
  %v60 = vsub.s32 0, %v59
  %v61 = vsel %vm55, %v60, %v59
  %vm62 = vcmp.lt.s32.totalorder %v36, 0
  %v63 = vsub.s32 0, %v36
  %v64 = vsel %vm62, %v63, %v36
  %v65 = vshrl.u32 %v64, 4
  %v66 = vand.u32 %v64, 15
  %v67 = vsub.s32 0, %v66
  %v68 = vsel %vm62, %v67, %v66
  %vm69 = vcmp.lt.s32.totalorder %v37, 0
  %v70 = vsub.s32 0, %v37
  %v71 = vsel %vm69, %v70, %v37
  %v72 = vshrl.u32 %v71, 4
  %v73 = vand.u32 %v71, 15
  %v74 = vsub.s32 0, %v73
  %v75 = vsel %vm69, %v74, %v73
  %vm76 = vcmp.lt.s32.totalorder %v38, 0
  %v77 = vsub.s32 0, %v38
  %v78 = vsel %vm76, %v77, %v38
  %v79 = vshrl.u32 %v78, 4
  %v80 = vand.u32 %v78, 15
  %v81 = vsub.s32 0, %v80
  %v82 = vsel %vm76, %v81, %v80
  %vm83 = vcmp.lt.s32.totalorder %v39, 0
  %v84 = vsub.s32 0, %v39
  %v85 = vsel %vm83, %v84, %v39
  %v86 = vshrl.u32 %v85, 4
  %v87 = vand.u32 %v85, 15
  %v88 = vsub.s32 0, %v87
  %v89 = vsel %vm83, %v88, %v87
  %vm90 = vcmp.lt.s32.totalorder %v40, 0
  %v91 = vsub.s32 0, %v40
  %v92 = vsel %vm90, %v91, %v40
  %v93 = vshrl.u32 %v92, 4
  %v94 = vand.u32 %v92, 15
  %v95 = vsub.s32 0, %v94
  %v96 = vsel %vm90, %v95, %v94
  %vm97 = vcmp.ne.s32.totalorder %v47, 0
  %vm98 = vcmp.ne.s32.totalorder %v54, 0
  %vm99 = vcmp.ne.s32.totalorder %v61, 0
  %vm100 = vcmp.ne.s32.totalorder %v68, 0
  %vm101 = vcmp.ne.s32.totalorder %v75, 0
  %vm102 = vcmp.ne.s32.totalorder %v82, 0
  %vm103 = vcmp.ne.s32.totalorder %v89, 0
  %vm104 = vcmp.ne.s32.totalorder %v96, 0
  %vm105 = vcmp.lt.s32.totalorder %v47, 0
  %vm106 = vcmp.lt.s32.totalorder %v54, 0
  %vm107 = vcmp.lt.s32.totalorder %v61, 0
  %vm108 = vcmp.lt.s32.totalorder %v68, 0
  %vm109 = vcmp.lt.s32.totalorder %v75, 0
  %vm110 = vcmp.lt.s32.totalorder %v82, 0
  %vm111 = vcmp.lt.s32.totalorder %v89, 0
  %vm112 = vcmp.lt.s32.totalorder %v96, 0
  %vm113 = vmand %vm105, %vm97
  %vm114 = vmand %vm106, %vm98
  %vm115 = vmand %vm107, %vm99
  %vm116 = vmand %vm108, %vm100
  %vm117 = vmand %vm109, %vm101
  %vm118 = vmand %vm110, %vm102
  %vm119 = vmand %vm111, %vm103
  %vm120 = vmand %vm112, %vm104
  %v121 = vadd.s32 %v47, 16
  %v122 = vadd.s32 %v54, 16
  %v123 = vadd.s32 %v61, 16
  %v124 = vadd.s32 %v68, 16
  %v125 = vadd.s32 %v75, 16
  %v126 = vadd.s32 %v82, 16
  %v127 = vadd.s32 %v89, 16
  %v128 = vadd.s32 %v96, 16
  %v129 = vsel %vm113, %v121, %v47
  %v130 = vsel %vm114, %v122, %v54
  %v131 = vsel %vm115, %v123, %v61
  %v132 = vsel %vm116, %v124, %v68
  %v133 = vsel %vm117, %v125, %v75
  %v134 = vsel %vm118, %v126, %v82
  %v135 = vsel %vm119, %v127, %v89
  %v136 = vsel %vm120, %v128, %v96
  %v137 = vlaneseq
  %v138 = vand.u32 %v137, 127
  %vm139 = vcmp.eq.s32.totalorder %v129, 0
  %vm140 = vcmp.eq.s32.totalorder %v130, 0
  %vm141 = vcmp.eq.s32.totalorder %v131, 0
  %vm142 = vcmp.eq.s32.totalorder %v132, 0
  %vm143 = vcmp.eq.s32.totalorder %v133, 0
  %vm144 = vcmp.eq.s32.totalorder %v134, 0
  %vm145 = vcmp.eq.s32.totalorder %v135, 0
  %vm146 = vcmp.eq.s32.totalorder %v136, 0
  %vm147 = vcmp.eq.s32.totalorder %v129, 15
  %vm148 = vcmp.eq.s32.totalorder %v130, 15
  %vm149 = vcmp.eq.s32.totalorder %v131, 15
  %vm150 = vcmp.eq.s32.totalorder %v132, 15
  %vm151 = vcmp.eq.s32.totalorder %v133, 15
  %vm152 = vcmp.eq.s32.totalorder %v134, 15
  %vm153 = vcmp.eq.s32.totalorder %v135, 15
  %vm154 = vcmp.eq.s32.totalorder %v136, 15
  %vm155 = vcmp.lt.s32.totalorder %v138, 8
  %vm156 = vcmp.ge.s32.totalorder %v138, 120
  %v157 = vrot.slane %v24, 7
  %v158 = vrot.slane %v25, 7
  %v159 = vrot.slane %v26, 7
  %v160 = vrot.slane %v27, 7
  %v161 = vrot.slane %v28, 7
  %v162 = vrot.slane %v29, 7
  %v163 = vrot.slane %v30, 7
  %v164 = vrot.slane %v31, 7
  %vm165 = vcmp.lt.s32.totalorder %v33, 1
  %v166 = vsel %vm165, %v163, %v164
  %v167 = vsel %vm165, %v162, %v163
  %v168 = vsel %vm165, %v161, %v162
  %v169 = vsel %vm165, %v160, %v161
  %v170 = vsel %vm165, %v159, %v160
  %v171 = vsel %vm165, %v158, %v159
  %v172 = vsel %vm165, %v157, %v158
  %v173 = vsel %vm165, %v164, %v157
  %v174 = vsel %vm139, 0.0, %v173
  %v175 = vsel %vm140, 0.0, %v172
  %v176 = vsel %vm141, 0.0, %v171
  %v177 = vsel %vm142, 0.0, %v170
  %v178 = vsel %vm143, 0.0, %v169
  %v179 = vsel %vm144, 0.0, %v168
  %v180 = vsel %vm145, 0.0, %v167
  %v181 = vsel %vm146, 0.0, %v166
  %v182 = vrot.slane %v24, 1
  %v183 = vrot.slane %v25, 1
  %v184 = vrot.slane %v26, 1
  %v185 = vrot.slane %v27, 1
  %v186 = vrot.slane %v28, 1
  %v187 = vrot.slane %v29, 1
  %v188 = vrot.slane %v30, 1
  %v189 = vrot.slane %v31, 1
  %vm190 = vcmp.lt.s32.totalorder %v33, 7
  %v191 = vsel %vm190, %v188, %v189
  %v192 = vsel %vm190, %v187, %v188
  %v193 = vsel %vm190, %v186, %v187
  %v194 = vsel %vm190, %v185, %v186
  %v195 = vsel %vm190, %v184, %v185
  %v196 = vsel %vm190, %v183, %v184
  %v197 = vsel %vm190, %v182, %v183
  %v198 = vsel %vm190, %v189, %v182
  %v199 = vsel %vm147, 0.0, %v197
  %v200 = vsel %vm148, 0.0, %v196
  %v201 = vsel %vm149, 0.0, %v195
  %v202 = vsel %vm150, 0.0, %v194
  %v203 = vsel %vm151, 0.0, %v193
  %v204 = vsel %vm152, 0.0, %v192
  %v205 = vsel %vm153, 0.0, %v191
  %v206 = vsel %vm154, 0.0, %v198
  %v207 = vpack.c.bf16 %v175, %v174
  %v208 = vpack.c.bf16 %v25, %v24
  %v209 = vpack.c.bf16 %v200, %v199
  %v210 = vpack.c.bf16 %v177, %v176
  %v211 = vpack.c.bf16 %v27, %v26
  %v212 = vpack.c.bf16 %v202, %v201
  %v213 = vpack.c.bf16 %v179, %v178
  %v214 = vpack.c.bf16 %v29, %v28
  %v215 = vpack.c.bf16 %v204, %v203
  %v216 = vpack.c.bf16 %v181, %v180
  %v217 = vpack.c.bf16 %v31, %v30
  %v218 = vpack.c.bf16 %v206, %v205
  %v219 = vld [vmem:[%s1] sm:$0xf]
  %v220 = vld [vmem:[%s1 + $0x4] sm:$0xf]
  %v221 = vld [vmem:[%s1 + $0x8] sm:$0xf]
  %v222 = vld [vmem:[%s1 + $0xc] sm:$0xf]
  %v223 = vld [vmem:[%s1 + $0x10] sm:$0xf]
  %v224 = vld [vmem:[%s1 + $0x14] sm:$0xf]
  %v225 = vld [vmem:[%s1 + $0x18] sm:$0xf]
  %v226 = vld [vmem:[%s1 + $0x1c] sm:$0xf]
  %v227 = vld [vmem:[%s1 + $0x20] sm:$0xf]
  %v228 = vld [vmem:[%s1 + $0x24] sm:$0xf]
  %v229 = vld [vmem:[%s1 + $0x28] sm:$0xf]
  %v230 = vld [vmem:[%s1 + $0x2c] sm:$0xf]
  %v231 = vld [vmem:[%s1 + $0x30] sm:$0xf]
  %v232 = vld [vmem:[%s1 + $0x34] sm:$0xf]
  %v233 = vld [vmem:[%s1 + $0x38] sm:$0xf]
  %v234 = vld [vmem:[%s1 + $0x3c] sm:$0xf]
  %v235 = vld [vmem:[%s1 + $0x40] sm:$0xf]
  %v236 = vld [vmem:[%s1 + $0x44] sm:$0xf]
  %v237 = vld [vmem:[%s1 + $0x48] sm:$0xf]
  %v238 = vld [vmem:[%s1 + $0x4c] sm:$0xf]
  %v239 = vld [vmem:[%s1 + $0x50] sm:$0xf]
  %v240 = vld [vmem:[%s1 + $0x54] sm:$0xf]
  %v241 = vld [vmem:[%s1 + $0x58] sm:$0xf]
  %v242 = vld [vmem:[%s1 + $0x5c] sm:$0xf]
  %v243 = vld [vmem:[%s1 + $0x60] sm:$0xf]
  %v244 = vld [vmem:[%s1 + $0x64] sm:$0xf]
  %v245 = vld [vmem:[%s1 + $0x68] sm:$0xf]
  %v246 = vld [vmem:[%s1 + $0x6c] sm:$0xf]
  %v247 = vld [vmem:[%s1 + $0x70] sm:$0xf]
  %v248 = vld [vmem:[%s1 + $0x74] sm:$0xf]
  %v249 = vld [vmem:[%s1 + $0x78] sm:$0xf]
  %v250 = vld [vmem:[%s1 + $0x7c] sm:$0xf]
  %v251 = vld [vmem:[%s1 + $0x80] sm:$0xf]
  %v252 = vld [vmem:[%s1 + $0x84] sm:$0xf]
  %v253 = vld [vmem:[%s1 + $0x88] sm:$0xf]
  %v254 = vld [vmem:[%s1 + $0x8c] sm:$0xf]
  %v255 = vld [vmem:[%s1 + $0x90] sm:$0xf]
  %v256 = vld [vmem:[%s1 + $0x94] sm:$0xf]
  %v257 = vld [vmem:[%s1 + $0x98] sm:$0xf]
  %v258 = vld [vmem:[%s1 + $0x9c] sm:$0xf]
  %v259 = vld [vmem:[%s1 + $0xa0] sm:$0xf]
  %v260 = vld [vmem:[%s1 + $0xa4] sm:$0xf]
  %v261 = vld [vmem:[%s1 + $0xa8] sm:$0xf]
  %v262 = vld [vmem:[%s1 + $0xac] sm:$0xf]
  %v263 = vld [vmem:[%s1 + $0xb0] sm:$0xf]
  %v264 = vld [vmem:[%s1 + $0xb4] sm:$0xf]
  %v265 = vld [vmem:[%s1 + $0xb8] sm:$0xf]
  %v266 = vld [vmem:[%s1 + $0xbc] sm:$0xf]
  %v267 = vld [vmem:[%s2] sm:$0x1]
  %v269 = vlaneseq
  %v270 = vshrl.u32 %v269, 7
  %v271 = vsub.s32 0, %v270
  %v272 = vrot.slane %v267, %v271
  %v322 = vunpack.c.l.b16 %v219
  %v323 = vunpack.c.l.b16 %v220
  %v324 = vunpack.c.l.b16 %v221
  %v325 = vunpack.c.l.b16 %v222
  %v326 = vunpack.c.l.b16 %v223
  %v327 = vunpack.c.l.b16 %v224
  %v328 = vunpack.c.l.b16 %v225
  %v329 = vunpack.c.l.b16 %v226
  %v330 = vunpack.c.l.b16 %v227
  %v331 = vunpack.c.l.b16 %v228
  %v332 = vunpack.c.l.b16 %v229
  %v333 = vunpack.c.l.b16 %v230
  %v334 = vunpack.c.l.b16 %v231
  %v335 = vunpack.c.l.b16 %v232
  %v336 = vunpack.c.l.b16 %v233
  %v337 = vunpack.c.l.b16 %v234
  %v338 = vunpack.c.l.b16 %v235
  %v339 = vunpack.c.l.b16 %v236
  %v340 = vunpack.c.l.b16 %v237
  %v341 = vunpack.c.l.b16 %v238
  %v342 = vunpack.c.l.b16 %v239
  %v343 = vunpack.c.l.b16 %v240
  %v344 = vunpack.c.l.b16 %v241
  %v345 = vunpack.c.l.b16 %v242
  %v346 = vunpack.c.l.b16 %v243
  %v347 = vunpack.c.l.b16 %v244
  %v348 = vunpack.c.l.b16 %v245
  %v349 = vunpack.c.l.b16 %v246
  %v350 = vunpack.c.l.b16 %v247
  %v351 = vunpack.c.l.b16 %v248
  %v352 = vunpack.c.l.b16 %v249
  %v353 = vunpack.c.l.b16 %v250
  %v354 = vunpack.c.l.b16 %v251
  %v355 = vunpack.c.l.b16 %v252
  %v356 = vunpack.c.l.b16 %v253
  %v357 = vunpack.c.l.b16 %v254
  %v358 = vunpack.c.l.b16 %v255
  %v359 = vunpack.c.l.b16 %v256
  %v360 = vunpack.c.l.b16 %v257
  %v361 = vunpack.c.l.b16 %v258
  %v362 = vunpack.c.l.b16 %v259
  %v363 = vunpack.c.l.b16 %v260
  %v364 = vunpack.c.l.b16 %v261
  %v365 = vunpack.c.l.b16 %v262
  %v366 = vunpack.c.l.b16 %v263
  %v367 = vunpack.c.l.b16 %v264
  %v368 = vunpack.c.l.b16 %v265
  %v369 = vunpack.c.l.b16 %v266
  %v370 = vpack.c.b16 %v323, %v322
  %v371 = vpack.c.b16 %v325, %v324
  %v372 = vpack.c.b16 %v327, %v326
  %v373 = vpack.c.b16 %v329, %v328
  %v374 = vpack.c.b16 %v331, %v330
  %v375 = vpack.c.b16 %v333, %v332
  %v376 = vpack.c.b16 %v335, %v334
  %v377 = vpack.c.b16 %v337, %v336
  %v378 = vpack.c.b16 %v339, %v338
  %v379 = vpack.c.b16 %v341, %v340
  %v380 = vpack.c.b16 %v343, %v342
  %v381 = vpack.c.b16 %v345, %v344
  %v382 = vpack.c.b16 %v347, %v346
  %v383 = vpack.c.b16 %v349, %v348
  %v384 = vpack.c.b16 %v351, %v350
  %v385 = vpack.c.b16 %v353, %v352
  %v386 = vpack.c.b16 %v355, %v354
  %v387 = vpack.c.b16 %v357, %v356
  %v388 = vpack.c.b16 %v359, %v358
  %v389 = vpack.c.b16 %v361, %v360
  %v390 = vpack.c.b16 %v363, %v362
  %v391 = vpack.c.b16 %v365, %v364
  %v392 = vpack.c.b16 %v367, %v366
  %v393 = vpack.c.b16 %v369, %v368
  %418 = vmatprep.subr.bf16.mxu0 0
  %419 = vmatpush1.bf16.msra.mxu0 %v377
  %420 = vmatprep.subr.bf16.mxu0 0
  %421 = vmatpush1.bf16.msra.mxu0 %v376
  %422 = vmatprep.subr.bf16.mxu0 0
  %423 = vmatpush1.bf16.msra.mxu0 %v375
  %424 = vmatprep.subr.bf16.mxu0 0
  %425 = vmatpush1.bf16.msra.mxu0 %v374
  %426 = vmatprep.subr.bf16.mxu0 0
  %427 = vmatpush1.bf16.msra.mxu0 %v373
  %428 = vmatprep.subr.bf16.mxu0 0
  %429 = vmatpush1.bf16.msra.mxu0 %v372
  %430 = vmatprep.subr.bf16.mxu0 0
  %431 = vmatpush1.bf16.msra.mxu0 %v371
  %432 = vmatprep.subr.bf16.mxu0 0
  %433 = vmatpush1.bf16.msra.mxu0 %v370
  %434 = vmatprep.subr.bf16.mxu0 0
  %435 = vmatpush2.bf16.msra.mxu0 %v385
  %436 = vmatprep.subr.bf16.mxu0 0
  %437 = vmatpush2.bf16.msra.mxu0 %v384
  %438 = vmatprep.subr.bf16.mxu0 0
  %439 = vmatpush2.bf16.msra.mxu0 %v383
  %440 = vmatprep.subr.bf16.mxu0 0
  %441 = vmatpush2.bf16.msra.mxu0 %v382
  %442 = vmatprep.subr.bf16.mxu0 0
  %443 = vmatpush2.bf16.msra.mxu0 %v381
  %444 = vmatprep.subr.bf16.mxu0 0
  %445 = vmatpush2.bf16.msra.mxu0 %v380
  %446 = vmatprep.subr.bf16.mxu0 0
  %447 = vmatpush2.bf16.msra.mxu0 %v379
  %448 = vmatprep.subr.bf16.mxu0 0
  %449 = vmatpush2.bf16.msra.mxu0 %v378
  %450 = vmatprep.mubr.bf16.mxu0 %v208
  %451 = vmatmul.mubr.bf16.gmra.mxu0 %v207
  %v452 = vpop.f32.mrf.mxu0
  %v453 = vadd.f32 %v272, %v452
  %v454 = vpop.f32.mrf.mxu0
  %v455 = vpop.f32.mrf.mxu0
  %v456 = vadd.f32 %v272, %v455
  %v457 = vpop.f32.mrf.mxu0
  %458 = vmatprep.mubr.bf16.mxu0 %v211
  %459 = vmatmul.mubr.bf16.gmra.mxu0 %v210
  %v460 = vpop.f32.mrf.mxu0
  %v461 = vadd.f32 %v272, %v460
  %v462 = vpop.f32.mrf.mxu0
  %v463 = vpop.f32.mrf.mxu0
  %v464 = vadd.f32 %v272, %v463
  %v465 = vpop.f32.mrf.mxu0
  %466 = vmatprep.mubr.bf16.mxu0 %v214
  %467 = vmatmul.mubr.bf16.gmra.mxu0 %v213
  %v468 = vpop.f32.mrf.mxu0
  %v469 = vadd.f32 %v272, %v468
  %v470 = vpop.f32.mrf.mxu0
  %v471 = vpop.f32.mrf.mxu0
  %v472 = vadd.f32 %v272, %v471
  %v473 = vpop.f32.mrf.mxu0
  %474 = vmatprep.mubr.bf16.mxu0 %v217
  %475 = vmatmul.mubr.bf16.gmra.mxu0 %v216
  %v476 = vpop.f32.mrf.mxu0
  %v477 = vadd.f32 %v272, %v476
  %v478 = vpop.f32.mrf.mxu0
  %v479 = vpop.f32.mrf.mxu0
  %v480 = vadd.f32 %v272, %v479
  %v481 = vpop.f32.mrf.mxu0
  %482 = vdwg.mxu0
  %483 = vmatprep.subr.bf16.mxu0 0
  %484 = vmatpush1.bf16.msra.mxu0 %v393
  %485 = vmatprep.subr.bf16.mxu0 0
  %486 = vmatpush1.bf16.msra.mxu0 %v392
  %487 = vmatprep.subr.bf16.mxu0 0
  %488 = vmatpush1.bf16.msra.mxu0 %v391
  %489 = vmatprep.subr.bf16.mxu0 0
  %490 = vmatpush1.bf16.msra.mxu0 %v390
  %491 = vmatprep.subr.bf16.mxu0 0
  %492 = vmatpush1.bf16.msra.mxu0 %v389
  %493 = vmatprep.subr.bf16.mxu0 0
  %494 = vmatpush1.bf16.msra.mxu0 %v388
  %495 = vmatprep.subr.bf16.mxu0 0
  %496 = vmatpush1.bf16.msra.mxu0 %v387
  %497 = vmatprep.subr.bf16.mxu0 0
  %498 = vmatpush1.bf16.msra.mxu0 %v386
  %499 = vmatprep.subr.bf16.mxu0 0
  %500 = vmatpush2.bf16.msra.mxu0 0
  %501 = vmatprep.subr.bf16.mxu0 0
  %502 = vmatpush2.bf16.msra.mxu0 0
  %503 = vmatprep.subr.bf16.mxu0 0
  %504 = vmatpush2.bf16.msra.mxu0 0
  %505 = vmatprep.subr.bf16.mxu0 0
  %506 = vmatpush2.bf16.msra.mxu0 0
  %507 = vmatprep.subr.bf16.mxu0 0
  %508 = vmatpush2.bf16.msra.mxu0 0
  %509 = vmatprep.subr.bf16.mxu0 0
  %510 = vmatpush2.bf16.msra.mxu0 0
  %511 = vmatprep.subr.bf16.mxu0 0
  %512 = vmatpush2.bf16.msra.mxu0 0
  %513 = vmatprep.subr.bf16.mxu0 0
  %514 = vmatpush2.bf16.msra.mxu0 0
  %515 = vmatprep.mubr.bf16.mxu0 0
  %516 = vmatmul.mubr.bf16.gmra.mxu0 %v209
  %v517 = vpop.f32.mrf.mxu0
  %v518 = vadd.f32 %v453, %v517
  %v519 = vpop.f32.mrf.mxu0
  %v520 = vpop.f32.mrf.mxu0
  %v521 = vadd.f32 %v456, %v520
  %v522 = vpop.f32.mrf.mxu0
  %523 = vmatprep.mubr.bf16.mxu0 0
  %524 = vmatmul.mubr.bf16.gmra.mxu0 %v212
  %v525 = vpop.f32.mrf.mxu0
  %v526 = vadd.f32 %v461, %v525
  %v527 = vpop.f32.mrf.mxu0
  %v528 = vpop.f32.mrf.mxu0
  %v529 = vadd.f32 %v464, %v528
  %v530 = vpop.f32.mrf.mxu0
  %531 = vmatprep.mubr.bf16.mxu0 0
  %532 = vmatmul.mubr.bf16.gmra.mxu0 %v215
  %v533 = vpop.f32.mrf.mxu0
  %v534 = vadd.f32 %v469, %v533
  %v535 = vpop.f32.mrf.mxu0
  %v536 = vpop.f32.mrf.mxu0
  %v537 = vadd.f32 %v472, %v536
  %v538 = vpop.f32.mrf.mxu0
  %539 = vmatprep.mubr.bf16.mxu0 0
  %540 = vmatmul.mubr.bf16.gmra.mxu0 %v218
  %v541 = vpop.f32.mrf.mxu0
  %v542 = vadd.f32 %v477, %v541
  %v543 = vpop.f32.mrf.mxu0
  %v544 = vpop.f32.mrf.mxu0
  %v545 = vadd.f32 %v480, %v544
  %v546 = vpop.f32.mrf.mxu0
  %547 = vdwg.mxu0
  %v548 = vmax.f32 %v518, 0.0
  %v549 = vmax.f32 %v521, 0.0
  %v550 = vmax.f32 %v526, 0.0
  %v551 = vmax.f32 %v529, 0.0
  %v552 = vmax.f32 %v534, 0.0
  %v553 = vmax.f32 %v537, 0.0
  %v554 = vmax.f32 %v542, 0.0
  %v555 = vmax.f32 %v545, 0.0
  %v556 = vrot.slane %v548, 7
  %v557 = vrot.slane %v549, 7
  %v558 = vrot.slane %v550, 7
  %v559 = vrot.slane %v551, 7
  %v560 = vrot.slane %v552, 7
  %v561 = vrot.slane %v553, 7
  %v562 = vrot.slane %v554, 7
  %v563 = vrot.slane %v555, 7
  %v564 = vsel %vm165, %v562, %v563
  %v565 = vsel %vm165, %v561, %v562
  %v566 = vsel %vm165, %v560, %v561
  %v567 = vsel %vm165, %v559, %v560
  %v568 = vsel %vm165, %v558, %v559
  %v569 = vsel %vm165, %v557, %v558
  %v570 = vsel %vm165, %v556, %v557
  %v571 = vsel %vm165, %v563, %v556
  %v572 = vsel %vm139, 0.0, %v571
  %v573 = vsel %vm140, 0.0, %v570
  %v574 = vsel %vm141, 0.0, %v569
  %v575 = vsel %vm142, 0.0, %v568
  %v576 = vsel %vm143, 0.0, %v567
  %v577 = vsel %vm144, 0.0, %v566
  %v578 = vsel %vm145, 0.0, %v565
  %v579 = vsel %vm146, 0.0, %v564
  %v580 = vrot.slane %v548, 1
  %v581 = vrot.slane %v549, 1
  %v582 = vrot.slane %v550, 1
  %v583 = vrot.slane %v551, 1
  %v584 = vrot.slane %v552, 1
  %v585 = vrot.slane %v553, 1
  %v586 = vrot.slane %v554, 1
  %v587 = vrot.slane %v555, 1
  %v588 = vsel %vm190, %v586, %v587
  %v589 = vsel %vm190, %v585, %v586
  %v590 = vsel %vm190, %v584, %v585
  %v591 = vsel %vm190, %v583, %v584
  %v592 = vsel %vm190, %v582, %v583
  %v593 = vsel %vm190, %v581, %v582
  %v594 = vsel %vm190, %v580, %v581
  %v595 = vsel %vm190, %v587, %v580
  %v596 = vsel %vm147, 0.0, %v594
  %v597 = vsel %vm148, 0.0, %v593
  %v598 = vsel %vm149, 0.0, %v592
  %v599 = vsel %vm150, 0.0, %v591
  %v600 = vsel %vm151, 0.0, %v590
  %v601 = vsel %vm152, 0.0, %v589
  %v602 = vsel %vm153, 0.0, %v588
  %v603 = vsel %vm154, 0.0, %v595
  %v604 = vpack.c.bf16 %v573, %v572
  %v605 = vpack.c.bf16 %v549, %v548
  %v606 = vpack.c.bf16 %v597, %v596
  %v607 = vpack.c.bf16 %v575, %v574
  %v608 = vpack.c.bf16 %v551, %v550
  %v609 = vpack.c.bf16 %v599, %v598
  %v610 = vpack.c.bf16 %v577, %v576
  %v611 = vpack.c.bf16 %v553, %v552
  %v612 = vpack.c.bf16 %v601, %v600
  %v613 = vpack.c.bf16 %v579, %v578
  %v614 = vpack.c.bf16 %v555, %v554
  %v615 = vpack.c.bf16 %v603, %v602
  %s616 = scalar_lea.vmem %s1, 192
  %v617 = vld [vmem:[%s616] sm:$0xf]
  %v618 = vld [vmem:[%s616 + $0x4] sm:$0xf]
  %v619 = vld [vmem:[%s616 + $0x8] sm:$0xf]
  %v620 = vld [vmem:[%s616 + $0xc] sm:$0xf]
  %v621 = vld [vmem:[%s616 + $0x10] sm:$0xf]
  %v622 = vld [vmem:[%s616 + $0x14] sm:$0xf]
  %v623 = vld [vmem:[%s616 + $0x18] sm:$0xf]
  %v624 = vld [vmem:[%s616 + $0x1c] sm:$0xf]
  %v625 = vld [vmem:[%s616 + $0x20] sm:$0xf]
  %v626 = vld [vmem:[%s616 + $0x24] sm:$0xf]
  %v627 = vld [vmem:[%s616 + $0x28] sm:$0xf]
  %v628 = vld [vmem:[%s616 + $0x2c] sm:$0xf]
  %v629 = vld [vmem:[%s616 + $0x30] sm:$0xf]
  %v630 = vld [vmem:[%s616 + $0x34] sm:$0xf]
  %v631 = vld [vmem:[%s616 + $0x38] sm:$0xf]
  %v632 = vld [vmem:[%s616 + $0x3c] sm:$0xf]
  %v633 = vld [vmem:[%s616 + $0x40] sm:$0xf]
  %v634 = vld [vmem:[%s616 + $0x44] sm:$0xf]
  %v635 = vld [vmem:[%s616 + $0x48] sm:$0xf]
  %v636 = vld [vmem:[%s616 + $0x4c] sm:$0xf]
  %v637 = vld [vmem:[%s616 + $0x50] sm:$0xf]
  %v638 = vld [vmem:[%s616 + $0x54] sm:$0xf]
  %v639 = vld [vmem:[%s616 + $0x58] sm:$0xf]
  %v640 = vld [vmem:[%s616 + $0x5c] sm:$0xf]
  %v641 = vld [vmem:[%s616 + $0x60] sm:$0xf]
  %v642 = vld [vmem:[%s616 + $0x64] sm:$0xf]
  %v643 = vld [vmem:[%s616 + $0x68] sm:$0xf]
  %v644 = vld [vmem:[%s616 + $0x6c] sm:$0xf]
  %v645 = vld [vmem:[%s616 + $0x70] sm:$0xf]
  %v646 = vld [vmem:[%s616 + $0x74] sm:$0xf]
  %v647 = vld [vmem:[%s616 + $0x78] sm:$0xf]
  %v648 = vld [vmem:[%s616 + $0x7c] sm:$0xf]
  %v649 = vld [vmem:[%s616 + $0x80] sm:$0xf]
  %v650 = vld [vmem:[%s616 + $0x84] sm:$0xf]
  %v651 = vld [vmem:[%s616 + $0x88] sm:$0xf]
  %v652 = vld [vmem:[%s616 + $0x8c] sm:$0xf]
  %v653 = vld [vmem:[%s616 + $0x90] sm:$0xf]
  %v654 = vld [vmem:[%s616 + $0x94] sm:$0xf]
  %v655 = vld [vmem:[%s616 + $0x98] sm:$0xf]
  %v656 = vld [vmem:[%s616 + $0x9c] sm:$0xf]
  %v657 = vld [vmem:[%s616 + $0xa0] sm:$0xf]
  %v658 = vld [vmem:[%s616 + $0xa4] sm:$0xf]
  %v659 = vld [vmem:[%s616 + $0xa8] sm:$0xf]
  %v660 = vld [vmem:[%s616 + $0xac] sm:$0xf]
  %v661 = vld [vmem:[%s616 + $0xb0] sm:$0xf]
  %v662 = vld [vmem:[%s616 + $0xb4] sm:$0xf]
  %v663 = vld [vmem:[%s616 + $0xb8] sm:$0xf]
  %v664 = vld [vmem:[%s616 + $0xbc] sm:$0xf]
  %s665 = scalar_lea.vmem %s2, 1
  %v666 = vld [vmem:[%s665] sm:$0x1]
  %v668 = vlaneseq
  %v669 = vshrl.u32 %v668, 7
  %v670 = vsub.s32 0, %v669
  %v671 = vrot.slane %v666, %v670
  %v721 = vunpack.c.l.b16 %v617
  %v722 = vunpack.c.l.b16 %v618
  %v723 = vunpack.c.l.b16 %v619
  %v724 = vunpack.c.l.b16 %v620
  %v725 = vunpack.c.l.b16 %v621
  %v726 = vunpack.c.l.b16 %v622
  %v727 = vunpack.c.l.b16 %v623
  %v728 = vunpack.c.l.b16 %v624
  %v729 = vunpack.c.l.b16 %v625
  %v730 = vunpack.c.l.b16 %v626
  %v731 = vunpack.c.l.b16 %v627
  %v732 = vunpack.c.l.b16 %v628
  %v733 = vunpack.c.l.b16 %v629
  %v734 = vunpack.c.l.b16 %v630
  %v735 = vunpack.c.l.b16 %v631
  %v736 = vunpack.c.l.b16 %v632
  %v737 = vunpack.c.l.b16 %v633
  %v738 = vunpack.c.l.b16 %v634
  %v739 = vunpack.c.l.b16 %v635
  %v740 = vunpack.c.l.b16 %v636
  %v741 = vunpack.c.l.b16 %v637
  %v742 = vunpack.c.l.b16 %v638
  %v743 = vunpack.c.l.b16 %v639
  %v744 = vunpack.c.l.b16 %v640
  %v745 = vunpack.c.l.b16 %v641
  %v746 = vunpack.c.l.b16 %v642
  %v747 = vunpack.c.l.b16 %v643
  %v748 = vunpack.c.l.b16 %v644
  %v749 = vunpack.c.l.b16 %v645
  %v750 = vunpack.c.l.b16 %v646
  %v751 = vunpack.c.l.b16 %v647
  %v752 = vunpack.c.l.b16 %v648
  %v753 = vunpack.c.l.b16 %v649
  %v754 = vunpack.c.l.b16 %v650
  %v755 = vunpack.c.l.b16 %v651
  %v756 = vunpack.c.l.b16 %v652
  %v757 = vunpack.c.l.b16 %v653
  %v758 = vunpack.c.l.b16 %v654
  %v759 = vunpack.c.l.b16 %v655
  %v760 = vunpack.c.l.b16 %v656
  %v761 = vunpack.c.l.b16 %v657
  %v762 = vunpack.c.l.b16 %v658
  %v763 = vunpack.c.l.b16 %v659
  %v764 = vunpack.c.l.b16 %v660
  %v765 = vunpack.c.l.b16 %v661
  %v766 = vunpack.c.l.b16 %v662
  %v767 = vunpack.c.l.b16 %v663
  %v768 = vunpack.c.l.b16 %v664
  %v769 = vpack.c.b16 %v722, %v721
  %v770 = vpack.c.b16 %v724, %v723
  %v771 = vpack.c.b16 %v726, %v725
  %v772 = vpack.c.b16 %v728, %v727
  %v773 = vpack.c.b16 %v730, %v729
  %v774 = vpack.c.b16 %v732, %v731
  %v775 = vpack.c.b16 %v734, %v733
  %v776 = vpack.c.b16 %v736, %v735
  %v777 = vpack.c.b16 %v738, %v737
  %v778 = vpack.c.b16 %v740, %v739
  %v779 = vpack.c.b16 %v742, %v741
  %v780 = vpack.c.b16 %v744, %v743
  %v781 = vpack.c.b16 %v746, %v745
  %v782 = vpack.c.b16 %v748, %v747
  %v783 = vpack.c.b16 %v750, %v749
  %v784 = vpack.c.b16 %v752, %v751
  %v785 = vpack.c.b16 %v754, %v753
  %v786 = vpack.c.b16 %v756, %v755
  %v787 = vpack.c.b16 %v758, %v757
  %v788 = vpack.c.b16 %v760, %v759
  %v789 = vpack.c.b16 %v762, %v761
  %v790 = vpack.c.b16 %v764, %v763
  %v791 = vpack.c.b16 %v766, %v765
  %v792 = vpack.c.b16 %v768, %v767
  %817 = vmatprep.subr.bf16.mxu0 0
  %818 = vmatpush1.bf16.msra.mxu0 %v776
  %819 = vmatprep.subr.bf16.mxu0 0
  %820 = vmatpush1.bf16.msra.mxu0 %v775
  %821 = vmatprep.subr.bf16.mxu0 0
  %822 = vmatpush1.bf16.msra.mxu0 %v774
  %823 = vmatprep.subr.bf16.mxu0 0
  %824 = vmatpush1.bf16.msra.mxu0 %v773
  %825 = vmatprep.subr.bf16.mxu0 0
  %826 = vmatpush1.bf16.msra.mxu0 %v772
  %827 = vmatprep.subr.bf16.mxu0 0
  %828 = vmatpush1.bf16.msra.mxu0 %v771
  %829 = vmatprep.subr.bf16.mxu0 0
  %830 = vmatpush1.bf16.msra.mxu0 %v770
  %831 = vmatprep.subr.bf16.mxu0 0
  %832 = vmatpush1.bf16.msra.mxu0 %v769
  %833 = vmatprep.subr.bf16.mxu0 0
  %834 = vmatpush2.bf16.msra.mxu0 %v784
  %835 = vmatprep.subr.bf16.mxu0 0
  %836 = vmatpush2.bf16.msra.mxu0 %v783
  %837 = vmatprep.subr.bf16.mxu0 0
  %838 = vmatpush2.bf16.msra.mxu0 %v782
  %839 = vmatprep.subr.bf16.mxu0 0
  %840 = vmatpush2.bf16.msra.mxu0 %v781
  %841 = vmatprep.subr.bf16.mxu0 0
  %842 = vmatpush2.bf16.msra.mxu0 %v780
  %843 = vmatprep.subr.bf16.mxu0 0
  %844 = vmatpush2.bf16.msra.mxu0 %v779
  %845 = vmatprep.subr.bf16.mxu0 0
  %846 = vmatpush2.bf16.msra.mxu0 %v778
  %847 = vmatprep.subr.bf16.mxu0 0
  %848 = vmatpush2.bf16.msra.mxu0 %v777
  %849 = vmatprep.mubr.bf16.mxu0 %v605
  %850 = vmatmul.mubr.bf16.gmra.mxu0 %v604
  %v851 = vpop.f32.mrf.mxu0
  %v852 = vadd.f32 %v671, %v851
  %v853 = vpop.f32.mrf.mxu0
  %v854 = vpop.f32.mrf.mxu0
  %v855 = vadd.f32 %v671, %v854
  %v856 = vpop.f32.mrf.mxu0
  %857 = vmatprep.mubr.bf16.mxu0 %v608
  %858 = vmatmul.mubr.bf16.gmra.mxu0 %v607
  %v859 = vpop.f32.mrf.mxu0
  %v860 = vadd.f32 %v671, %v859
  %v861 = vpop.f32.mrf.mxu0
  %v862 = vpop.f32.mrf.mxu0
  %v863 = vadd.f32 %v671, %v862
  %v864 = vpop.f32.mrf.mxu0
  %865 = vmatprep.mubr.bf16.mxu0 %v611
  %866 = vmatmul.mubr.bf16.gmra.mxu0 %v610
  %v867 = vpop.f32.mrf.mxu0
  %v868 = vadd.f32 %v671, %v867
  %v869 = vpop.f32.mrf.mxu0
  %v870 = vpop.f32.mrf.mxu0
  %v871 = vadd.f32 %v671, %v870
  %v872 = vpop.f32.mrf.mxu0
  %873 = vmatprep.mubr.bf16.mxu0 %v614
  %874 = vmatmul.mubr.bf16.gmra.mxu0 %v613
  %v875 = vpop.f32.mrf.mxu0
  %v876 = vadd.f32 %v671, %v875
  %v877 = vpop.f32.mrf.mxu0
  %v878 = vpop.f32.mrf.mxu0
  %v879 = vadd.f32 %v671, %v878
  %v880 = vpop.f32.mrf.mxu0
  %881 = vdwg.mxu0
  %882 = vmatprep.subr.bf16.mxu0 0
  %883 = vmatpush1.bf16.msra.mxu0 %v792
  %884 = vmatprep.subr.bf16.mxu0 0
  %885 = vmatpush1.bf16.msra.mxu0 %v791
  %886 = vmatprep.subr.bf16.mxu0 0
  %887 = vmatpush1.bf16.msra.mxu0 %v790
  %888 = vmatprep.subr.bf16.mxu0 0
  %889 = vmatpush1.bf16.msra.mxu0 %v789
  %890 = vmatprep.subr.bf16.mxu0 0
  %891 = vmatpush1.bf16.msra.mxu0 %v788
  %892 = vmatprep.subr.bf16.mxu0 0
  %893 = vmatpush1.bf16.msra.mxu0 %v787
  %894 = vmatprep.subr.bf16.mxu0 0
  %895 = vmatpush1.bf16.msra.mxu0 %v786
  %896 = vmatprep.subr.bf16.mxu0 0
  %897 = vmatpush1.bf16.msra.mxu0 %v785
  %898 = vmatprep.subr.bf16.mxu0 0
  %899 = vmatpush2.bf16.msra.mxu0 0
  %900 = vmatprep.subr.bf16.mxu0 0
  %901 = vmatpush2.bf16.msra.mxu0 0
  %902 = vmatprep.subr.bf16.mxu0 0
  %903 = vmatpush2.bf16.msra.mxu0 0
  %904 = vmatprep.subr.bf16.mxu0 0
  %905 = vmatpush2.bf16.msra.mxu0 0
  %906 = vmatprep.subr.bf16.mxu0 0
  %907 = vmatpush2.bf16.msra.mxu0 0
  %908 = vmatprep.subr.bf16.mxu0 0
  %909 = vmatpush2.bf16.msra.mxu0 0
  %910 = vmatprep.subr.bf16.mxu0 0
  %911 = vmatpush2.bf16.msra.mxu0 0
  %912 = vmatprep.subr.bf16.mxu0 0
  %913 = vmatpush2.bf16.msra.mxu0 0
  %914 = vmatprep.mubr.bf16.mxu0 0
  %915 = vmatmul.mubr.bf16.gmra.mxu0 %v606
  %v916 = vpop.f32.mrf.mxu0
  %v917 = vadd.f32 %v852, %v916
  %v918 = vpop.f32.mrf.mxu0
  %v919 = vpop.f32.mrf.mxu0
  %v920 = vadd.f32 %v855, %v919
  %v921 = vpop.f32.mrf.mxu0
  %922 = vmatprep.mubr.bf16.mxu0 0
  %923 = vmatmul.mubr.bf16.gmra.mxu0 %v609
  %v924 = vpop.f32.mrf.mxu0
  %v925 = vadd.f32 %v860, %v924
  %v926 = vpop.f32.mrf.mxu0
  %v927 = vpop.f32.mrf.mxu0
  %v928 = vadd.f32 %v863, %v927
  %v929 = vpop.f32.mrf.mxu0
  %930 = vmatprep.mubr.bf16.mxu0 0
  %931 = vmatmul.mubr.bf16.gmra.mxu0 %v612
  %v932 = vpop.f32.mrf.mxu0
  %v933 = vadd.f32 %v868, %v932
  %v934 = vpop.f32.mrf.mxu0
  %v935 = vpop.f32.mrf.mxu0
  %v936 = vadd.f32 %v871, %v935
  %v937 = vpop.f32.mrf.mxu0
  %938 = vmatprep.mubr.bf16.mxu0 0
  %939 = vmatmul.mubr.bf16.gmra.mxu0 %v615
  %v940 = vpop.f32.mrf.mxu0
  %v941 = vadd.f32 %v876, %v940
  %v942 = vpop.f32.mrf.mxu0
  %v943 = vpop.f32.mrf.mxu0
  %v944 = vadd.f32 %v879, %v943
  %v945 = vpop.f32.mrf.mxu0
  %946 = vdwg.mxu0
  %v947 = vmax.f32 %v917, 0.0
  %v948 = vmax.f32 %v920, 0.0
  %v949 = vmax.f32 %v925, 0.0
  %v950 = vmax.f32 %v928, 0.0
  %v951 = vmax.f32 %v933, 0.0
  %v952 = vmax.f32 %v936, 0.0
  %v953 = vmax.f32 %v941, 0.0
  %v954 = vmax.f32 %v944, 0.0
  %v955 = vrot.slane %v947, 7
  %v956 = vrot.slane %v948, 7
  %v957 = vrot.slane %v949, 7
  %v958 = vrot.slane %v950, 7
  %v959 = vrot.slane %v951, 7
  %v960 = vrot.slane %v952, 7
  %v961 = vrot.slane %v953, 7
  %v962 = vrot.slane %v954, 7
  %v963 = vsel %vm165, %v961, %v962
  %v964 = vsel %vm165, %v960, %v961
  %v965 = vsel %vm165, %v959, %v960
  %v966 = vsel %vm165, %v958, %v959
  %v967 = vsel %vm165, %v957, %v958
  %v968 = vsel %vm165, %v956, %v957
  %v969 = vsel %vm165, %v955, %v956
  %v970 = vsel %vm165, %v962, %v955
  %v971 = vsel %vm139, 0.0, %v970
  %v972 = vsel %vm140, 0.0, %v969
  %v973 = vsel %vm141, 0.0, %v968
  %v974 = vsel %vm142, 0.0, %v967
  %v975 = vsel %vm143, 0.0, %v966
  %v976 = vsel %vm144, 0.0, %v965
  %v977 = vsel %vm145, 0.0, %v964
  %v978 = vsel %vm146, 0.0, %v963
  %v979 = vrot.slane %v947, 1
  %v980 = vrot.slane %v948, 1
  %v981 = vrot.slane %v949, 1
  %v982 = vrot.slane %v950, 1
  %v983 = vrot.slane %v951, 1
  %v984 = vrot.slane %v952, 1
  %v985 = vrot.slane %v953, 1
  %v986 = vrot.slane %v954, 1
  %v987 = vsel %vm190, %v985, %v986
  %v988 = vsel %vm190, %v984, %v985
  %v989 = vsel %vm190, %v983, %v984
  %v990 = vsel %vm190, %v982, %v983
  %v991 = vsel %vm190, %v981, %v982
  %v992 = vsel %vm190, %v980, %v981
  %v993 = vsel %vm190, %v979, %v980
  %v994 = vsel %vm190, %v986, %v979
  %v995 = vsel %vm147, 0.0, %v993
  %v996 = vsel %vm148, 0.0, %v992
  %v997 = vsel %vm149, 0.0, %v991
  %v998 = vsel %vm150, 0.0, %v990
  %v999 = vsel %vm151, 0.0, %v989
  %v1000 = vsel %vm152, 0.0, %v988
  %v1001 = vsel %vm153, 0.0, %v987
  %v1002 = vsel %vm154, 0.0, %v994
  %v1003 = vpack.c.bf16 %v972, %v971
  %v1004 = vpack.c.bf16 %v948, %v947
  %v1005 = vpack.c.bf16 %v996, %v995
  %v1006 = vpack.c.bf16 %v974, %v973
  %v1007 = vpack.c.bf16 %v950, %v949
  %v1008 = vpack.c.bf16 %v998, %v997
  %v1009 = vpack.c.bf16 %v976, %v975
  %v1010 = vpack.c.bf16 %v952, %v951
  %v1011 = vpack.c.bf16 %v1000, %v999
  %v1012 = vpack.c.bf16 %v978, %v977
  %v1013 = vpack.c.bf16 %v954, %v953
  %v1014 = vpack.c.bf16 %v1002, %v1001
  %s1015 = scalar_lea.vmem %s1, 384
  %v1016 = vld [vmem:[%s1015] sm:$0xf]
  %v1017 = vld [vmem:[%s1015 + $0x4] sm:$0xf]
  %v1018 = vld [vmem:[%s1015 + $0x8] sm:$0xf]
  %v1019 = vld [vmem:[%s1015 + $0xc] sm:$0xf]
  %v1020 = vld [vmem:[%s1015 + $0x10] sm:$0xf]
  %v1021 = vld [vmem:[%s1015 + $0x14] sm:$0xf]
  %v1022 = vld [vmem:[%s1015 + $0x18] sm:$0xf]
  %v1023 = vld [vmem:[%s1015 + $0x1c] sm:$0xf]
  %v1024 = vld [vmem:[%s1015 + $0x20] sm:$0xf]
  %v1025 = vld [vmem:[%s1015 + $0x24] sm:$0xf]
  %v1026 = vld [vmem:[%s1015 + $0x28] sm:$0xf]
  %v1027 = vld [vmem:[%s1015 + $0x2c] sm:$0xf]
  %v1028 = vld [vmem:[%s1015 + $0x30] sm:$0xf]
  %v1029 = vld [vmem:[%s1015 + $0x34] sm:$0xf]
  %v1030 = vld [vmem:[%s1015 + $0x38] sm:$0xf]
  %v1031 = vld [vmem:[%s1015 + $0x3c] sm:$0xf]
  %v1032 = vld [vmem:[%s1015 + $0x40] sm:$0xf]
  %v1033 = vld [vmem:[%s1015 + $0x44] sm:$0xf]
  %v1034 = vld [vmem:[%s1015 + $0x48] sm:$0xf]
  %v1035 = vld [vmem:[%s1015 + $0x4c] sm:$0xf]
  %v1036 = vld [vmem:[%s1015 + $0x50] sm:$0xf]
  %v1037 = vld [vmem:[%s1015 + $0x54] sm:$0xf]
  %v1038 = vld [vmem:[%s1015 + $0x58] sm:$0xf]
  %v1039 = vld [vmem:[%s1015 + $0x5c] sm:$0xf]
  %v1040 = vld [vmem:[%s1015 + $0x60] sm:$0xf]
  %v1041 = vld [vmem:[%s1015 + $0x64] sm:$0xf]
  %v1042 = vld [vmem:[%s1015 + $0x68] sm:$0xf]
  %v1043 = vld [vmem:[%s1015 + $0x6c] sm:$0xf]
  %v1044 = vld [vmem:[%s1015 + $0x70] sm:$0xf]
  %v1045 = vld [vmem:[%s1015 + $0x74] sm:$0xf]
  %v1046 = vld [vmem:[%s1015 + $0x78] sm:$0xf]
  %v1047 = vld [vmem:[%s1015 + $0x7c] sm:$0xf]
  %v1048 = vld [vmem:[%s1015 + $0x80] sm:$0xf]
  %v1049 = vld [vmem:[%s1015 + $0x84] sm:$0xf]
  %v1050 = vld [vmem:[%s1015 + $0x88] sm:$0xf]
  %v1051 = vld [vmem:[%s1015 + $0x8c] sm:$0xf]
  %v1052 = vld [vmem:[%s1015 + $0x90] sm:$0xf]
  %v1053 = vld [vmem:[%s1015 + $0x94] sm:$0xf]
  %v1054 = vld [vmem:[%s1015 + $0x98] sm:$0xf]
  %v1055 = vld [vmem:[%s1015 + $0x9c] sm:$0xf]
  %v1056 = vld [vmem:[%s1015 + $0xa0] sm:$0xf]
  %v1057 = vld [vmem:[%s1015 + $0xa4] sm:$0xf]
  %v1058 = vld [vmem:[%s1015 + $0xa8] sm:$0xf]
  %v1059 = vld [vmem:[%s1015 + $0xac] sm:$0xf]
  %v1060 = vld [vmem:[%s1015 + $0xb0] sm:$0xf]
  %v1061 = vld [vmem:[%s1015 + $0xb4] sm:$0xf]
  %v1062 = vld [vmem:[%s1015 + $0xb8] sm:$0xf]
  %v1063 = vld [vmem:[%s1015 + $0xbc] sm:$0xf]
  %s1064 = scalar_lea.vmem %s2, 2
  %v1065 = vld [vmem:[%s1064] sm:$0x1]
  %v1067 = vlaneseq
  %v1068 = vshrl.u32 %v1067, 7
  %v1069 = vsub.s32 0, %v1068
  %v1070 = vrot.slane %v1065, %v1069
  %v1120 = vunpack.c.l.b16 %v1016
  %v1121 = vunpack.c.l.b16 %v1017
  %v1122 = vunpack.c.l.b16 %v1018
  %v1123 = vunpack.c.l.b16 %v1019
  %v1124 = vunpack.c.l.b16 %v1020
  %v1125 = vunpack.c.l.b16 %v1021
  %v1126 = vunpack.c.l.b16 %v1022
  %v1127 = vunpack.c.l.b16 %v1023
  %v1128 = vunpack.c.l.b16 %v1024
  %v1129 = vunpack.c.l.b16 %v1025
  %v1130 = vunpack.c.l.b16 %v1026
  %v1131 = vunpack.c.l.b16 %v1027
  %v1132 = vunpack.c.l.b16 %v1028
  %v1133 = vunpack.c.l.b16 %v1029
  %v1134 = vunpack.c.l.b16 %v1030
  %v1135 = vunpack.c.l.b16 %v1031
  %v1136 = vunpack.c.l.b16 %v1032
  %v1137 = vunpack.c.l.b16 %v1033
  %v1138 = vunpack.c.l.b16 %v1034
  %v1139 = vunpack.c.l.b16 %v1035
  %v1140 = vunpack.c.l.b16 %v1036
  %v1141 = vunpack.c.l.b16 %v1037
  %v1142 = vunpack.c.l.b16 %v1038
  %v1143 = vunpack.c.l.b16 %v1039
  %v1144 = vunpack.c.l.b16 %v1040
  %v1145 = vunpack.c.l.b16 %v1041
  %v1146 = vunpack.c.l.b16 %v1042
  %v1147 = vunpack.c.l.b16 %v1043
  %v1148 = vunpack.c.l.b16 %v1044
  %v1149 = vunpack.c.l.b16 %v1045
  %v1150 = vunpack.c.l.b16 %v1046
  %v1151 = vunpack.c.l.b16 %v1047
  %v1152 = vunpack.c.l.b16 %v1048
  %v1153 = vunpack.c.l.b16 %v1049
  %v1154 = vunpack.c.l.b16 %v1050
  %v1155 = vunpack.c.l.b16 %v1051
  %v1156 = vunpack.c.l.b16 %v1052
  %v1157 = vunpack.c.l.b16 %v1053
  %v1158 = vunpack.c.l.b16 %v1054
  %v1159 = vunpack.c.l.b16 %v1055
  %v1160 = vunpack.c.l.b16 %v1056
  %v1161 = vunpack.c.l.b16 %v1057
  %v1162 = vunpack.c.l.b16 %v1058
  %v1163 = vunpack.c.l.b16 %v1059
  %v1164 = vunpack.c.l.b16 %v1060
  %v1165 = vunpack.c.l.b16 %v1061
  %v1166 = vunpack.c.l.b16 %v1062
  %v1167 = vunpack.c.l.b16 %v1063
  %v1168 = vpack.c.b16 %v1121, %v1120
  %v1169 = vpack.c.b16 %v1123, %v1122
  %v1170 = vpack.c.b16 %v1125, %v1124
  %v1171 = vpack.c.b16 %v1127, %v1126
  %v1172 = vpack.c.b16 %v1129, %v1128
  %v1173 = vpack.c.b16 %v1131, %v1130
  %v1174 = vpack.c.b16 %v1133, %v1132
  %v1175 = vpack.c.b16 %v1135, %v1134
  %v1176 = vpack.c.b16 %v1137, %v1136
  %v1177 = vpack.c.b16 %v1139, %v1138
  %v1178 = vpack.c.b16 %v1141, %v1140
  %v1179 = vpack.c.b16 %v1143, %v1142
  %v1180 = vpack.c.b16 %v1145, %v1144
  %v1181 = vpack.c.b16 %v1147, %v1146
  %v1182 = vpack.c.b16 %v1149, %v1148
  %v1183 = vpack.c.b16 %v1151, %v1150
  %v1184 = vpack.c.b16 %v1153, %v1152
  %v1185 = vpack.c.b16 %v1155, %v1154
  %v1186 = vpack.c.b16 %v1157, %v1156
  %v1187 = vpack.c.b16 %v1159, %v1158
  %v1188 = vpack.c.b16 %v1161, %v1160
  %v1189 = vpack.c.b16 %v1163, %v1162
  %v1190 = vpack.c.b16 %v1165, %v1164
  %v1191 = vpack.c.b16 %v1167, %v1166
  %1216 = vmatprep.subr.bf16.mxu0 0
  %1217 = vmatpush1.bf16.msra.mxu0 %v1175
  %1218 = vmatprep.subr.bf16.mxu0 0
  %1219 = vmatpush1.bf16.msra.mxu0 %v1174
  %1220 = vmatprep.subr.bf16.mxu0 0
  %1221 = vmatpush1.bf16.msra.mxu0 %v1173
  %1222 = vmatprep.subr.bf16.mxu0 0
  %1223 = vmatpush1.bf16.msra.mxu0 %v1172
  %1224 = vmatprep.subr.bf16.mxu0 0
  %1225 = vmatpush1.bf16.msra.mxu0 %v1171
  %1226 = vmatprep.subr.bf16.mxu0 0
  %1227 = vmatpush1.bf16.msra.mxu0 %v1170
  %1228 = vmatprep.subr.bf16.mxu0 0
  %1229 = vmatpush1.bf16.msra.mxu0 %v1169
  %1230 = vmatprep.subr.bf16.mxu0 0
  %1231 = vmatpush1.bf16.msra.mxu0 %v1168
  %1232 = vmatprep.subr.bf16.mxu0 0
  %1233 = vmatpush2.bf16.msra.mxu0 %v1183
  %1234 = vmatprep.subr.bf16.mxu0 0
  %1235 = vmatpush2.bf16.msra.mxu0 %v1182
  %1236 = vmatprep.subr.bf16.mxu0 0
  %1237 = vmatpush2.bf16.msra.mxu0 %v1181
  %1238 = vmatprep.subr.bf16.mxu0 0
  %1239 = vmatpush2.bf16.msra.mxu0 %v1180
  %1240 = vmatprep.subr.bf16.mxu0 0
  %1241 = vmatpush2.bf16.msra.mxu0 %v1179
  %1242 = vmatprep.subr.bf16.mxu0 0
  %1243 = vmatpush2.bf16.msra.mxu0 %v1178
  %1244 = vmatprep.subr.bf16.mxu0 0
  %1245 = vmatpush2.bf16.msra.mxu0 %v1177
  %1246 = vmatprep.subr.bf16.mxu0 0
  %1247 = vmatpush2.bf16.msra.mxu0 %v1176
  %1248 = vmatprep.mubr.bf16.mxu0 %v1004
  %1249 = vmatmul.mubr.bf16.gmra.mxu0 %v1003
  %v1250 = vpop.f32.mrf.mxu0
  %v1251 = vadd.f32 %v1070, %v1250
  %v1252 = vpop.f32.mrf.mxu0
  %v1253 = vpop.f32.mrf.mxu0
  %v1254 = vadd.f32 %v1070, %v1253
  %v1255 = vpop.f32.mrf.mxu0
  %1256 = vmatprep.mubr.bf16.mxu0 %v1007
  %1257 = vmatmul.mubr.bf16.gmra.mxu0 %v1006
  %v1258 = vpop.f32.mrf.mxu0
  %v1259 = vadd.f32 %v1070, %v1258
  %v1260 = vpop.f32.mrf.mxu0
  %v1261 = vpop.f32.mrf.mxu0
  %v1262 = vadd.f32 %v1070, %v1261
  %v1263 = vpop.f32.mrf.mxu0
  %1264 = vmatprep.mubr.bf16.mxu0 %v1010
  %1265 = vmatmul.mubr.bf16.gmra.mxu0 %v1009
  %v1266 = vpop.f32.mrf.mxu0
  %v1267 = vadd.f32 %v1070, %v1266
  %v1268 = vpop.f32.mrf.mxu0
  %v1269 = vpop.f32.mrf.mxu0
  %v1270 = vadd.f32 %v1070, %v1269
  %v1271 = vpop.f32.mrf.mxu0
  %1272 = vmatprep.mubr.bf16.mxu0 %v1013
  %1273 = vmatmul.mubr.bf16.gmra.mxu0 %v1012
  %v1274 = vpop.f32.mrf.mxu0
  %v1275 = vadd.f32 %v1070, %v1274
  %v1276 = vpop.f32.mrf.mxu0
  %v1277 = vpop.f32.mrf.mxu0
  %v1278 = vadd.f32 %v1070, %v1277
  %v1279 = vpop.f32.mrf.mxu0
  %1280 = vdwg.mxu0
  %1281 = vmatprep.subr.bf16.mxu0 0
  %1282 = vmatpush1.bf16.msra.mxu0 %v1191
  %1283 = vmatprep.subr.bf16.mxu0 0
  %1284 = vmatpush1.bf16.msra.mxu0 %v1190
  %1285 = vmatprep.subr.bf16.mxu0 0
  %1286 = vmatpush1.bf16.msra.mxu0 %v1189
  %1287 = vmatprep.subr.bf16.mxu0 0
  %1288 = vmatpush1.bf16.msra.mxu0 %v1188
  %1289 = vmatprep.subr.bf16.mxu0 0
  %1290 = vmatpush1.bf16.msra.mxu0 %v1187
  %1291 = vmatprep.subr.bf16.mxu0 0
  %1292 = vmatpush1.bf16.msra.mxu0 %v1186
  %1293 = vmatprep.subr.bf16.mxu0 0
  %1294 = vmatpush1.bf16.msra.mxu0 %v1185
  %1295 = vmatprep.subr.bf16.mxu0 0
  %1296 = vmatpush1.bf16.msra.mxu0 %v1184
  %1297 = vmatprep.subr.bf16.mxu0 0
  %1298 = vmatpush2.bf16.msra.mxu0 0
  %1299 = vmatprep.subr.bf16.mxu0 0
  %1300 = vmatpush2.bf16.msra.mxu0 0
  %1301 = vmatprep.subr.bf16.mxu0 0
  %1302 = vmatpush2.bf16.msra.mxu0 0
  %1303 = vmatprep.subr.bf16.mxu0 0
  %1304 = vmatpush2.bf16.msra.mxu0 0
  %1305 = vmatprep.subr.bf16.mxu0 0
  %1306 = vmatpush2.bf16.msra.mxu0 0
  %1307 = vmatprep.subr.bf16.mxu0 0
  %1308 = vmatpush2.bf16.msra.mxu0 0
  %1309 = vmatprep.subr.bf16.mxu0 0
  %1310 = vmatpush2.bf16.msra.mxu0 0
  %1311 = vmatprep.subr.bf16.mxu0 0
  %1312 = vmatpush2.bf16.msra.mxu0 0
  %1313 = vmatprep.mubr.bf16.mxu0 0
  %1314 = vmatmul.mubr.bf16.gmra.mxu0 %v1005
  %v1315 = vpop.f32.mrf.mxu0
  %v1316 = vadd.f32 %v1251, %v1315
  %v1317 = vpop.f32.mrf.mxu0
  %v1318 = vpop.f32.mrf.mxu0
  %v1319 = vadd.f32 %v1254, %v1318
  %v1320 = vpop.f32.mrf.mxu0
  %1321 = vmatprep.mubr.bf16.mxu0 0
  %1322 = vmatmul.mubr.bf16.gmra.mxu0 %v1008
  %v1323 = vpop.f32.mrf.mxu0
  %v1324 = vadd.f32 %v1259, %v1323
  %v1325 = vpop.f32.mrf.mxu0
  %v1326 = vpop.f32.mrf.mxu0
  %v1327 = vadd.f32 %v1262, %v1326
  %v1328 = vpop.f32.mrf.mxu0
  %1329 = vmatprep.mubr.bf16.mxu0 0
  %1330 = vmatmul.mubr.bf16.gmra.mxu0 %v1011
  %v1331 = vpop.f32.mrf.mxu0
  %v1332 = vadd.f32 %v1267, %v1331
  %v1333 = vpop.f32.mrf.mxu0
  %v1334 = vpop.f32.mrf.mxu0
  %v1335 = vadd.f32 %v1270, %v1334
  %v1336 = vpop.f32.mrf.mxu0
  %1337 = vmatprep.mubr.bf16.mxu0 0
  %1338 = vmatmul.mubr.bf16.gmra.mxu0 %v1014
  %v1339 = vpop.f32.mrf.mxu0
  %v1340 = vadd.f32 %v1275, %v1339
  %v1341 = vpop.f32.mrf.mxu0
  %v1342 = vpop.f32.mrf.mxu0
  %v1343 = vadd.f32 %v1278, %v1342
  %v1344 = vpop.f32.mrf.mxu0
  %1345 = vdwg.mxu0
  %v1346 = vadd.f32 %v1316, %v548
  %v1347 = vadd.f32 %v1319, %v549
  %v1348 = vadd.f32 %v1324, %v550
  %v1349 = vadd.f32 %v1327, %v551
  %v1350 = vadd.f32 %v1332, %v552
  %v1351 = vadd.f32 %v1335, %v553
  %v1352 = vadd.f32 %v1340, %v554
  %v1353 = vadd.f32 %v1343, %v555
  %v1354 = vmax.f32 %v1346, 0.0
  %v1355 = vmax.f32 %v1347, 0.0
  %v1356 = vmax.f32 %v1348, 0.0
  %v1357 = vmax.f32 %v1349, 0.0
  %v1358 = vmax.f32 %v1350, 0.0
  %v1359 = vmax.f32 %v1351, 0.0
  %v1360 = vmax.f32 %v1352, 0.0
  %v1361 = vmax.f32 %v1353, 0.0
  %1362 = vrot.lane.b32.xlu0 %v572, 8
  %v1363 = vpop.permute.xlu0 %1362
  %1364 = vrot.lane.b32.xlu0 %v573, 8
  %v1365 = vpop.permute.xlu0 %1364
  %1366 = vrot.lane.b32.xlu0 %v574, 8
  %v1367 = vpop.permute.xlu0 %1366
  %1368 = vrot.lane.b32.xlu0 %v575, 8
  %v1369 = vpop.permute.xlu0 %1368
  %1370 = vrot.lane.b32.xlu0 %v576, 8
  %v1371 = vpop.permute.xlu0 %1370
  %1372 = vrot.lane.b32.xlu0 %v577, 8
  %v1373 = vpop.permute.xlu0 %1372
  %1374 = vrot.lane.b32.xlu0 %v578, 8
  %v1375 = vpop.permute.xlu0 %1374
  %1376 = vrot.lane.b32.xlu0 %v579, 8
  %v1377 = vpop.permute.xlu0 %1376
  %v1378 = vsel %vm155, 0.0, %v1363
  %v1379 = vsel %vm155, 0.0, %v1365
  %v1380 = vsel %vm155, 0.0, %v1367
  %v1381 = vsel %vm155, 0.0, %v1369
  %v1382 = vsel %vm155, 0.0, %v1371
  %v1383 = vsel %vm155, 0.0, %v1373
  %v1384 = vsel %vm155, 0.0, %v1375
  %v1385 = vsel %vm155, 0.0, %v1377
  %1386 = vrot.lane.b32.xlu0 %v572, 120
  %v1387 = vpop.permute.xlu0 %1386
  %1388 = vrot.lane.b32.xlu0 %v573, 120
  %v1389 = vpop.permute.xlu0 %1388
  %1390 = vrot.lane.b32.xlu0 %v574, 120
  %v1391 = vpop.permute.xlu0 %1390
  %1392 = vrot.lane.b32.xlu0 %v575, 120
  %v1393 = vpop.permute.xlu0 %1392
  %1394 = vrot.lane.b32.xlu0 %v576, 120
  %v1395 = vpop.permute.xlu0 %1394
  %1396 = vrot.lane.b32.xlu0 %v577, 120
  %v1397 = vpop.permute.xlu0 %1396
  %1398 = vrot.lane.b32.xlu0 %v578, 120
  %v1399 = vpop.permute.xlu0 %1398
  %1400 = vrot.lane.b32.xlu0 %v579, 120
  %v1401 = vpop.permute.xlu0 %1400
  %v1402 = vsel %vm156, 0.0, %v1387
  %v1403 = vsel %vm156, 0.0, %v1389
  %v1404 = vsel %vm156, 0.0, %v1391
  %v1405 = vsel %vm156, 0.0, %v1393
  %v1406 = vsel %vm156, 0.0, %v1395
  %v1407 = vsel %vm156, 0.0, %v1397
  %v1408 = vsel %vm156, 0.0, %v1399
  %v1409 = vsel %vm156, 0.0, %v1401
  %1410 = vrot.lane.b32.xlu0 %v548, 8
  %v1411 = vpop.permute.xlu0 %1410
  %1412 = vrot.lane.b32.xlu0 %v549, 8
  %v1413 = vpop.permute.xlu0 %1412
  %1414 = vrot.lane.b32.xlu0 %v550, 8
  %v1415 = vpop.permute.xlu0 %1414
  %1416 = vrot.lane.b32.xlu0 %v551, 8
  %v1417 = vpop.permute.xlu0 %1416
  %1418 = vrot.lane.b32.xlu0 %v552, 8
  %v1419 = vpop.permute.xlu0 %1418
  %1420 = vrot.lane.b32.xlu0 %v553, 8
  %v1421 = vpop.permute.xlu0 %1420
  %1422 = vrot.lane.b32.xlu0 %v554, 8
  %v1423 = vpop.permute.xlu0 %1422
  %1424 = vrot.lane.b32.xlu0 %v555, 8
  %v1425 = vpop.permute.xlu0 %1424
  %v1426 = vsel %vm155, 0.0, %v1411
  %v1427 = vsel %vm155, 0.0, %v1413
  %v1428 = vsel %vm155, 0.0, %v1415
  %v1429 = vsel %vm155, 0.0, %v1417
  %v1430 = vsel %vm155, 0.0, %v1419
  %v1431 = vsel %vm155, 0.0, %v1421
  %v1432 = vsel %vm155, 0.0, %v1423
  %v1433 = vsel %vm155, 0.0, %v1425
  %1434 = vrot.lane.b32.xlu0 %v548, 120
  %v1435 = vpop.permute.xlu0 %1434
  %1436 = vrot.lane.b32.xlu0 %v549, 120
  %v1437 = vpop.permute.xlu0 %1436
  %1438 = vrot.lane.b32.xlu0 %v550, 120
  %v1439 = vpop.permute.xlu0 %1438
  %1440 = vrot.lane.b32.xlu0 %v551, 120
  %v1441 = vpop.permute.xlu0 %1440
  %1442 = vrot.lane.b32.xlu0 %v552, 120
  %v1443 = vpop.permute.xlu0 %1442
  %1444 = vrot.lane.b32.xlu0 %v553, 120
  %v1445 = vpop.permute.xlu0 %1444
  %1446 = vrot.lane.b32.xlu0 %v554, 120
  %v1447 = vpop.permute.xlu0 %1446
  %1448 = vrot.lane.b32.xlu0 %v555, 120
  %v1449 = vpop.permute.xlu0 %1448
  %v1450 = vsel %vm156, 0.0, %v1435
  %v1451 = vsel %vm156, 0.0, %v1437
  %v1452 = vsel %vm156, 0.0, %v1439
  %v1453 = vsel %vm156, 0.0, %v1441
  %v1454 = vsel %vm156, 0.0, %v1443
  %v1455 = vsel %vm156, 0.0, %v1445
  %v1456 = vsel %vm156, 0.0, %v1447
  %v1457 = vsel %vm156, 0.0, %v1449
  %1458 = vrot.lane.b32.xlu0 %v596, 8
  %v1459 = vpop.permute.xlu0 %1458
  %1460 = vrot.lane.b32.xlu0 %v597, 8
  %v1461 = vpop.permute.xlu0 %1460
  %1462 = vrot.lane.b32.xlu0 %v598, 8
  %v1463 = vpop.permute.xlu0 %1462
  %1464 = vrot.lane.b32.xlu0 %v599, 8
  %v1465 = vpop.permute.xlu0 %1464
  %1466 = vrot.lane.b32.xlu0 %v600, 8
  %v1467 = vpop.permute.xlu0 %1466
  %1468 = vrot.lane.b32.xlu0 %v601, 8
  %v1469 = vpop.permute.xlu0 %1468
  %1470 = vrot.lane.b32.xlu0 %v602, 8
  %v1471 = vpop.permute.xlu0 %1470
  %1472 = vrot.lane.b32.xlu0 %v603, 8
  %v1473 = vpop.permute.xlu0 %1472
  %v1474 = vsel %vm155, 0.0, %v1459
  %v1475 = vsel %vm155, 0.0, %v1461
  %v1476 = vsel %vm155, 0.0, %v1463
  %v1477 = vsel %vm155, 0.0, %v1465
  %v1478 = vsel %vm155, 0.0, %v1467
  %v1479 = vsel %vm155, 0.0, %v1469
  %v1480 = vsel %vm155, 0.0, %v1471
  %v1481 = vsel %vm155, 0.0, %v1473
  %1482 = vrot.lane.b32.xlu0 %v596, 120
  %v1483 = vpop.permute.xlu0 %1482
  %1484 = vrot.lane.b32.xlu0 %v597, 120
  %v1485 = vpop.permute.xlu0 %1484
  %1486 = vrot.lane.b32.xlu0 %v598, 120
  %v1487 = vpop.permute.xlu0 %1486
  %1488 = vrot.lane.b32.xlu0 %v599, 120
  %v1489 = vpop.permute.xlu0 %1488
  %1490 = vrot.lane.b32.xlu0 %v600, 120
  %v1491 = vpop.permute.xlu0 %1490
  %1492 = vrot.lane.b32.xlu0 %v601, 120
  %v1493 = vpop.permute.xlu0 %1492
  %1494 = vrot.lane.b32.xlu0 %v602, 120
  %v1495 = vpop.permute.xlu0 %1494
  %1496 = vrot.lane.b32.xlu0 %v603, 120
  %v1497 = vpop.permute.xlu0 %1496
  %v1498 = vsel %vm156, 0.0, %v1483
  %v1499 = vsel %vm156, 0.0, %v1485
  %v1500 = vsel %vm156, 0.0, %v1487
  %v1501 = vsel %vm156, 0.0, %v1489
  %v1502 = vsel %vm156, 0.0, %v1491
  %v1503 = vsel %vm156, 0.0, %v1493
  %v1504 = vsel %vm156, 0.0, %v1495
  %v1505 = vsel %vm156, 0.0, %v1497
  %v1506 = vsub.f32 %v1378, %v1402
  %v1507 = vsub.f32 %v1379, %v1403
  %v1508 = vsub.f32 %v1380, %v1404
  %v1509 = vsub.f32 %v1381, %v1405
  %v1510 = vsub.f32 %v1382, %v1406
  %v1511 = vsub.f32 %v1383, %v1407
  %v1512 = vsub.f32 %v1384, %v1408
  %v1513 = vsub.f32 %v1385, %v1409
  %v1514 = vmul.f32 %v1506, 3.0
  %v1515 = vmul.f32 %v1507, 3.0
  %v1516 = vmul.f32 %v1508, 3.0
  %v1517 = vmul.f32 %v1509, 3.0
  %v1518 = vmul.f32 %v1510, 3.0
  %v1519 = vmul.f32 %v1511, 3.0
  %v1520 = vmul.f32 %v1512, 3.0
  %v1521 = vmul.f32 %v1513, 3.0
  %v1522 = vsub.f32 %v1426, %v1450
  %v1523 = vsub.f32 %v1427, %v1451
  %v1524 = vsub.f32 %v1428, %v1452
  %v1525 = vsub.f32 %v1429, %v1453
  %v1526 = vsub.f32 %v1430, %v1454
  %v1527 = vsub.f32 %v1431, %v1455
  %v1528 = vsub.f32 %v1432, %v1456
  %v1529 = vsub.f32 %v1433, %v1457
  %v1530 = vmul.f32 %v1522, 10.0
  %v1531 = vmul.f32 %v1523, 10.0
  %v1532 = vmul.f32 %v1524, 10.0
  %v1533 = vmul.f32 %v1525, 10.0
  %v1534 = vmul.f32 %v1526, 10.0
  %v1535 = vmul.f32 %v1527, 10.0
  %v1536 = vmul.f32 %v1528, 10.0
  %v1537 = vmul.f32 %v1529, 10.0
  %v1538 = vadd.f32 %v1514, %v1530
  %v1539 = vadd.f32 %v1515, %v1531
  %v1540 = vadd.f32 %v1516, %v1532
  %v1541 = vadd.f32 %v1517, %v1533
  %v1542 = vadd.f32 %v1518, %v1534
  %v1543 = vadd.f32 %v1519, %v1535
  %v1544 = vadd.f32 %v1520, %v1536
  %v1545 = vadd.f32 %v1521, %v1537
  %v1546 = vsub.f32 %v1474, %v1498
  %v1547 = vsub.f32 %v1475, %v1499
  %v1548 = vsub.f32 %v1476, %v1500
  %v1549 = vsub.f32 %v1477, %v1501
  %v1550 = vsub.f32 %v1478, %v1502
  %v1551 = vsub.f32 %v1479, %v1503
  %v1552 = vsub.f32 %v1480, %v1504
  %v1553 = vsub.f32 %v1481, %v1505
  %v1554 = vmul.f32 %v1546, 3.0
  %v1555 = vmul.f32 %v1547, 3.0
  %v1556 = vmul.f32 %v1548, 3.0
  %v1557 = vmul.f32 %v1549, 3.0
  %v1558 = vmul.f32 %v1550, 3.0
  %v1559 = vmul.f32 %v1551, 3.0
  %v1560 = vmul.f32 %v1552, 3.0
  %v1561 = vmul.f32 %v1553, 3.0
  %v1562 = vadd.f32 %v1538, %v1554
  %v1563 = vadd.f32 %v1539, %v1555
  %v1564 = vadd.f32 %v1540, %v1556
  %v1565 = vadd.f32 %v1541, %v1557
  %v1566 = vadd.f32 %v1542, %v1558
  %v1567 = vadd.f32 %v1543, %v1559
  %v1568 = vadd.f32 %v1544, %v1560
  %v1569 = vadd.f32 %v1545, %v1561
  %v1570 = vadd.f32 %v1378, %v1402
  %v1571 = vadd.f32 %v1379, %v1403
  %v1572 = vadd.f32 %v1380, %v1404
  %v1573 = vadd.f32 %v1381, %v1405
  %v1574 = vadd.f32 %v1382, %v1406
  %v1575 = vadd.f32 %v1383, %v1407
  %v1576 = vadd.f32 %v1384, %v1408
  %v1577 = vadd.f32 %v1385, %v1409
  %v1578 = vmul.f32 %v1570, 3.0
  %v1579 = vmul.f32 %v1571, 3.0
  %v1580 = vmul.f32 %v1572, 3.0
  %v1581 = vmul.f32 %v1573, 3.0
  %v1582 = vmul.f32 %v1574, 3.0
  %v1583 = vmul.f32 %v1575, 3.0
  %v1584 = vmul.f32 %v1576, 3.0
  %v1585 = vmul.f32 %v1577, 3.0
  %v1586 = vmul.f32 %v572, 10.0
  %v1587 = vmul.f32 %v573, 10.0
  %v1588 = vmul.f32 %v574, 10.0
  %v1589 = vmul.f32 %v575, 10.0
  %v1590 = vmul.f32 %v576, 10.0
  %v1591 = vmul.f32 %v577, 10.0
  %v1592 = vmul.f32 %v578, 10.0
  %v1593 = vmul.f32 %v579, 10.0
  %v1594 = vadd.f32 %v1578, %v1586
  %v1595 = vadd.f32 %v1579, %v1587
  %v1596 = vadd.f32 %v1580, %v1588
  %v1597 = vadd.f32 %v1581, %v1589
  %v1598 = vadd.f32 %v1582, %v1590
  %v1599 = vadd.f32 %v1583, %v1591
  %v1600 = vadd.f32 %v1584, %v1592
  %v1601 = vadd.f32 %v1585, %v1593
  %v1602 = vadd.f32 %v1474, %v1498
  %v1603 = vadd.f32 %v1475, %v1499
  %v1604 = vadd.f32 %v1476, %v1500
  %v1605 = vadd.f32 %v1477, %v1501
  %v1606 = vadd.f32 %v1478, %v1502
  %v1607 = vadd.f32 %v1479, %v1503
  %v1608 = vadd.f32 %v1480, %v1504
  %v1609 = vadd.f32 %v1481, %v1505
  %v1610 = vmul.f32 %v1602, 3.0
  %v1611 = vmul.f32 %v1603, 3.0
  %v1612 = vmul.f32 %v1604, 3.0
  %v1613 = vmul.f32 %v1605, 3.0
  %v1614 = vmul.f32 %v1606, 3.0
  %v1615 = vmul.f32 %v1607, 3.0
  %v1616 = vmul.f32 %v1608, 3.0
  %v1617 = vmul.f32 %v1609, 3.0
  %v1618 = vsub.f32 %v1594, %v1610
  %v1619 = vsub.f32 %v1595, %v1611
  %v1620 = vsub.f32 %v1596, %v1612
  %v1621 = vsub.f32 %v1597, %v1613
  %v1622 = vsub.f32 %v1598, %v1614
  %v1623 = vsub.f32 %v1599, %v1615
  %v1624 = vsub.f32 %v1600, %v1616
  %v1625 = vsub.f32 %v1601, %v1617
  %v1626 = vmul.f32 %v596, 10.0
  %v1627 = vmul.f32 %v597, 10.0
  %v1628 = vmul.f32 %v598, 10.0
  %v1629 = vmul.f32 %v599, 10.0
  %v1630 = vmul.f32 %v600, 10.0
  %v1631 = vmul.f32 %v601, 10.0
  %v1632 = vmul.f32 %v602, 10.0
  %v1633 = vmul.f32 %v603, 10.0
  %v1634 = vsub.f32 %v1618, %v1626
  %v1635 = vsub.f32 %v1619, %v1627
  %v1636 = vsub.f32 %v1620, %v1628
  %v1637 = vsub.f32 %v1621, %v1629
  %v1638 = vsub.f32 %v1622, %v1630
  %v1639 = vsub.f32 %v1623, %v1631
  %v1640 = vsub.f32 %v1624, %v1632
  %v1641 = vsub.f32 %v1625, %v1633
  %v1642 = vmul.f32 %v1562, %v1562
  %v1643 = vmul.f32 %v1563, %v1563
  %v1644 = vmul.f32 %v1564, %v1564
  %v1645 = vmul.f32 %v1565, %v1565
  %v1646 = vmul.f32 %v1566, %v1566
  %v1647 = vmul.f32 %v1567, %v1567
  %v1648 = vmul.f32 %v1568, %v1568
  %v1649 = vmul.f32 %v1569, %v1569
  %v1650 = vmul.f32 %v1634, %v1634
  %v1651 = vmul.f32 %v1635, %v1635
  %v1652 = vmul.f32 %v1636, %v1636
  %v1653 = vmul.f32 %v1637, %v1637
  %v1654 = vmul.f32 %v1638, %v1638
  %v1655 = vmul.f32 %v1639, %v1639
  %v1656 = vmul.f32 %v1640, %v1640
  %v1657 = vmul.f32 %v1641, %v1641
  %v1658 = vadd.f32 %v1642, %v1650
  %v1659 = vadd.f32 %v1643, %v1651
  %v1660 = vadd.f32 %v1644, %v1652
  %v1661 = vadd.f32 %v1645, %v1653
  %v1662 = vadd.f32 %v1646, %v1654
  %v1663 = vadd.f32 %v1647, %v1655
  %v1664 = vadd.f32 %v1648, %v1656
  %v1665 = vadd.f32 %v1649, %v1657
  %v1666 = vadd.f32 %v1658, 1e-06
  %v1667 = vadd.f32 %v1659, 1e-06
  %v1668 = vadd.f32 %v1660, 1e-06
  %v1669 = vadd.f32 %v1661, 1e-06
  %v1670 = vadd.f32 %v1662, 1e-06
  %v1671 = vadd.f32 %v1663, 1e-06
  %v1672 = vadd.f32 %v1664, 1e-06
  %v1673 = vadd.f32 %v1665, 1e-06
  %v1674 = vrsqrt.pop %v1666
  %v1675 = vmul.f32 %v1666, %v1674
  %vm1676 = vcmp.eq.f32.partialorder %v1666, inf
  %v1677 = vsel %vm1676, %v1666, %v1675
  %vm1678 = vcmp.eq.f32.partialorder %v1666, 0.0
  %v1679 = vand.u32 %v1666, 2147483648
  %v1680 = vsel %vm1678, %v1679, %v1677
  %v1681 = vrsqrt.pop %v1667
  %v1682 = vmul.f32 %v1667, %v1681
  %vm1683 = vcmp.eq.f32.partialorder %v1667, inf
  %v1684 = vsel %vm1683, %v1667, %v1682
  %vm1685 = vcmp.eq.f32.partialorder %v1667, 0.0
  %v1686 = vand.u32 %v1667, 2147483648
  %v1687 = vsel %vm1685, %v1686, %v1684
  %v1688 = vrsqrt.pop %v1668
  %v1689 = vmul.f32 %v1668, %v1688
  %vm1690 = vcmp.eq.f32.partialorder %v1668, inf
  %v1691 = vsel %vm1690, %v1668, %v1689
  %vm1692 = vcmp.eq.f32.partialorder %v1668, 0.0
  %v1693 = vand.u32 %v1668, 2147483648
  %v1694 = vsel %vm1692, %v1693, %v1691
  %v1695 = vrsqrt.pop %v1669
  %v1696 = vmul.f32 %v1669, %v1695
  %vm1697 = vcmp.eq.f32.partialorder %v1669, inf
  %v1698 = vsel %vm1697, %v1669, %v1696
  %vm1699 = vcmp.eq.f32.partialorder %v1669, 0.0
  %v1700 = vand.u32 %v1669, 2147483648
  %v1701 = vsel %vm1699, %v1700, %v1698
  %v1702 = vrsqrt.pop %v1670
  %v1703 = vmul.f32 %v1670, %v1702
  %vm1704 = vcmp.eq.f32.partialorder %v1670, inf
  %v1705 = vsel %vm1704, %v1670, %v1703
  %vm1706 = vcmp.eq.f32.partialorder %v1670, 0.0
  %v1707 = vand.u32 %v1670, 2147483648
  %v1708 = vsel %vm1706, %v1707, %v1705
  %v1709 = vrsqrt.pop %v1671
  %v1710 = vmul.f32 %v1671, %v1709
  %vm1711 = vcmp.eq.f32.partialorder %v1671, inf
  %v1712 = vsel %vm1711, %v1671, %v1710
  %vm1713 = vcmp.eq.f32.partialorder %v1671, 0.0
  %v1714 = vand.u32 %v1671, 2147483648
  %v1715 = vsel %vm1713, %v1714, %v1712
  %v1716 = vrsqrt.pop %v1672
  %v1717 = vmul.f32 %v1672, %v1716
  %vm1718 = vcmp.eq.f32.partialorder %v1672, inf
  %v1719 = vsel %vm1718, %v1672, %v1717
  %vm1720 = vcmp.eq.f32.partialorder %v1672, 0.0
  %v1721 = vand.u32 %v1672, 2147483648
  %v1722 = vsel %vm1720, %v1721, %v1719
  %v1723 = vrsqrt.pop %v1673
  %v1724 = vmul.f32 %v1673, %v1723
  %vm1725 = vcmp.eq.f32.partialorder %v1673, inf
  %v1726 = vsel %vm1725, %v1673, %v1724
  %vm1727 = vcmp.eq.f32.partialorder %v1673, 0.0
  %v1728 = vand.u32 %v1673, 2147483648
  %v1729 = vsel %vm1727, %v1728, %v1726
  %v1730 = vadd.f32 %v548, %v1680
  %v1731 = vadd.f32 %v549, %v1687
  %v1732 = vadd.f32 %v550, %v1694
  %v1733 = vadd.f32 %v551, %v1701
  %v1734 = vadd.f32 %v552, %v1708
  %v1735 = vadd.f32 %v553, %v1715
  %v1736 = vadd.f32 %v554, %v1722
  %v1737 = vadd.f32 %v555, %v1729
  %v1738 = vrot.slane %v1730, 7
  %v1739 = vrot.slane %v1731, 7
  %v1740 = vrot.slane %v1732, 7
  %v1741 = vrot.slane %v1733, 7
  %v1742 = vrot.slane %v1734, 7
  %v1743 = vrot.slane %v1735, 7
  %v1744 = vrot.slane %v1736, 7
  %v1745 = vrot.slane %v1737, 7
  %v1746 = vsel %vm165, %v1744, %v1745
  %v1747 = vsel %vm165, %v1743, %v1744
  %v1748 = vsel %vm165, %v1742, %v1743
  %v1749 = vsel %vm165, %v1741, %v1742
  %v1750 = vsel %vm165, %v1740, %v1741
  %v1751 = vsel %vm165, %v1739, %v1740
  %v1752 = vsel %vm165, %v1738, %v1739
  %v1753 = vsel %vm165, %v1745, %v1738
  %v1754 = vsel %vm139, 0.0, %v1753
  %v1755 = vsel %vm140, 0.0, %v1752
  %v1756 = vsel %vm141, 0.0, %v1751
  %v1757 = vsel %vm142, 0.0, %v1750
  %v1758 = vsel %vm143, 0.0, %v1749
  %v1759 = vsel %vm144, 0.0, %v1748
  %v1760 = vsel %vm145, 0.0, %v1747
  %v1761 = vsel %vm146, 0.0, %v1746
  %v1762 = vrot.slane %v1730, 1
  %v1763 = vrot.slane %v1731, 1
  %v1764 = vrot.slane %v1732, 1
  %v1765 = vrot.slane %v1733, 1
  %v1766 = vrot.slane %v1734, 1
  %v1767 = vrot.slane %v1735, 1
  %v1768 = vrot.slane %v1736, 1
  %v1769 = vrot.slane %v1737, 1
  %v1770 = vsel %vm190, %v1768, %v1769
  %v1771 = vsel %vm190, %v1767, %v1768
  %v1772 = vsel %vm190, %v1766, %v1767
  %v1773 = vsel %vm190, %v1765, %v1766
  %v1774 = vsel %vm190, %v1764, %v1765
  %v1775 = vsel %vm190, %v1763, %v1764
  %v1776 = vsel %vm190, %v1762, %v1763
  %v1777 = vsel %vm190, %v1769, %v1762
  %v1778 = vsel %vm147, 0.0, %v1776
  %v1779 = vsel %vm148, 0.0, %v1775
  %v1780 = vsel %vm149, 0.0, %v1774
  %v1781 = vsel %vm150, 0.0, %v1773
  %v1782 = vsel %vm151, 0.0, %v1772
  %v1783 = vsel %vm152, 0.0, %v1771
  %v1784 = vsel %vm153, 0.0, %v1770
  %v1785 = vsel %vm154, 0.0, %v1777
  %v1786 = vpack.c.bf16 %v1755, %v1754
  %v1787 = vpack.c.bf16 %v1731, %v1730
  %v1788 = vpack.c.bf16 %v1779, %v1778
  %v1789 = vpack.c.bf16 %v1757, %v1756
  %v1790 = vpack.c.bf16 %v1733, %v1732
  %v1791 = vpack.c.bf16 %v1781, %v1780
  %v1792 = vpack.c.bf16 %v1759, %v1758
  %v1793 = vpack.c.bf16 %v1735, %v1734
  %v1794 = vpack.c.bf16 %v1783, %v1782
  %v1795 = vpack.c.bf16 %v1761, %v1760
  %v1796 = vpack.c.bf16 %v1737, %v1736
  %v1797 = vpack.c.bf16 %v1785, %v1784
  %s1798 = scalar_lea.vmem %s1, 576
  %v1799 = vld [vmem:[%s1798] sm:$0xf]
  %v1800 = vld [vmem:[%s1798 + $0x4] sm:$0xf]
  %v1801 = vld [vmem:[%s1798 + $0x8] sm:$0xf]
  %v1802 = vld [vmem:[%s1798 + $0xc] sm:$0xf]
  %v1803 = vld [vmem:[%s1798 + $0x10] sm:$0xf]
  %v1804 = vld [vmem:[%s1798 + $0x14] sm:$0xf]
  %v1805 = vld [vmem:[%s1798 + $0x18] sm:$0xf]
  %v1806 = vld [vmem:[%s1798 + $0x1c] sm:$0xf]
  %v1807 = vld [vmem:[%s1798 + $0x20] sm:$0xf]
  %v1808 = vld [vmem:[%s1798 + $0x24] sm:$0xf]
  %v1809 = vld [vmem:[%s1798 + $0x28] sm:$0xf]
  %v1810 = vld [vmem:[%s1798 + $0x2c] sm:$0xf]
  %v1811 = vld [vmem:[%s1798 + $0x30] sm:$0xf]
  %v1812 = vld [vmem:[%s1798 + $0x34] sm:$0xf]
  %v1813 = vld [vmem:[%s1798 + $0x38] sm:$0xf]
  %v1814 = vld [vmem:[%s1798 + $0x3c] sm:$0xf]
  %v1815 = vld [vmem:[%s1798 + $0x40] sm:$0xf]
  %v1816 = vld [vmem:[%s1798 + $0x44] sm:$0xf]
  %v1817 = vld [vmem:[%s1798 + $0x48] sm:$0xf]
  %v1818 = vld [vmem:[%s1798 + $0x4c] sm:$0xf]
  %v1819 = vld [vmem:[%s1798 + $0x50] sm:$0xf]
  %v1820 = vld [vmem:[%s1798 + $0x54] sm:$0xf]
  %v1821 = vld [vmem:[%s1798 + $0x58] sm:$0xf]
  %v1822 = vld [vmem:[%s1798 + $0x5c] sm:$0xf]
  %v1823 = vld [vmem:[%s1798 + $0x60] sm:$0xf]
  %v1824 = vld [vmem:[%s1798 + $0x64] sm:$0xf]
  %v1825 = vld [vmem:[%s1798 + $0x68] sm:$0xf]
  %v1826 = vld [vmem:[%s1798 + $0x6c] sm:$0xf]
  %v1827 = vld [vmem:[%s1798 + $0x70] sm:$0xf]
  %v1828 = vld [vmem:[%s1798 + $0x74] sm:$0xf]
  %v1829 = vld [vmem:[%s1798 + $0x78] sm:$0xf]
  %v1830 = vld [vmem:[%s1798 + $0x7c] sm:$0xf]
  %v1831 = vld [vmem:[%s1798 + $0x80] sm:$0xf]
  %v1832 = vld [vmem:[%s1798 + $0x84] sm:$0xf]
  %v1833 = vld [vmem:[%s1798 + $0x88] sm:$0xf]
  %v1834 = vld [vmem:[%s1798 + $0x8c] sm:$0xf]
  %v1835 = vld [vmem:[%s1798 + $0x90] sm:$0xf]
  %v1836 = vld [vmem:[%s1798 + $0x94] sm:$0xf]
  %v1837 = vld [vmem:[%s1798 + $0x98] sm:$0xf]
  %v1838 = vld [vmem:[%s1798 + $0x9c] sm:$0xf]
  %v1839 = vld [vmem:[%s1798 + $0xa0] sm:$0xf]
  %v1840 = vld [vmem:[%s1798 + $0xa4] sm:$0xf]
  %v1841 = vld [vmem:[%s1798 + $0xa8] sm:$0xf]
  %v1842 = vld [vmem:[%s1798 + $0xac] sm:$0xf]
  %v1843 = vld [vmem:[%s1798 + $0xb0] sm:$0xf]
  %v1844 = vld [vmem:[%s1798 + $0xb4] sm:$0xf]
  %v1845 = vld [vmem:[%s1798 + $0xb8] sm:$0xf]
  %v1846 = vld [vmem:[%s1798 + $0xbc] sm:$0xf]
  %s1847 = scalar_lea.vmem %s2, 3
  %v1848 = vld [vmem:[%s1847] sm:$0x1]
  %v1850 = vlaneseq
  %v1851 = vshrl.u32 %v1850, 7
  %v1852 = vsub.s32 0, %v1851
  %v1853 = vrot.slane %v1848, %v1852
  %v1903 = vunpack.c.l.b16 %v1799
  %v1904 = vunpack.c.l.b16 %v1800
  %v1905 = vunpack.c.l.b16 %v1801
  %v1906 = vunpack.c.l.b16 %v1802
  %v1907 = vunpack.c.l.b16 %v1803
  %v1908 = vunpack.c.l.b16 %v1804
  %v1909 = vunpack.c.l.b16 %v1805
  %v1910 = vunpack.c.l.b16 %v1806
  %v1911 = vunpack.c.l.b16 %v1807
  %v1912 = vunpack.c.l.b16 %v1808
  %v1913 = vunpack.c.l.b16 %v1809
  %v1914 = vunpack.c.l.b16 %v1810
  %v1915 = vunpack.c.l.b16 %v1811
  %v1916 = vunpack.c.l.b16 %v1812
  %v1917 = vunpack.c.l.b16 %v1813
  %v1918 = vunpack.c.l.b16 %v1814
  %v1919 = vunpack.c.l.b16 %v1815
  %v1920 = vunpack.c.l.b16 %v1816
  %v1921 = vunpack.c.l.b16 %v1817
  %v1922 = vunpack.c.l.b16 %v1818
  %v1923 = vunpack.c.l.b16 %v1819
  %v1924 = vunpack.c.l.b16 %v1820
  %v1925 = vunpack.c.l.b16 %v1821
  %v1926 = vunpack.c.l.b16 %v1822
  %v1927 = vunpack.c.l.b16 %v1823
  %v1928 = vunpack.c.l.b16 %v1824
  %v1929 = vunpack.c.l.b16 %v1825
  %v1930 = vunpack.c.l.b16 %v1826
  %v1931 = vunpack.c.l.b16 %v1827
  %v1932 = vunpack.c.l.b16 %v1828
  %v1933 = vunpack.c.l.b16 %v1829
  %v1934 = vunpack.c.l.b16 %v1830
  %v1935 = vunpack.c.l.b16 %v1831
  %v1936 = vunpack.c.l.b16 %v1832
  %v1937 = vunpack.c.l.b16 %v1833
  %v1938 = vunpack.c.l.b16 %v1834
  %v1939 = vunpack.c.l.b16 %v1835
  %v1940 = vunpack.c.l.b16 %v1836
  %v1941 = vunpack.c.l.b16 %v1837
  %v1942 = vunpack.c.l.b16 %v1838
  %v1943 = vunpack.c.l.b16 %v1839
  %v1944 = vunpack.c.l.b16 %v1840
  %v1945 = vunpack.c.l.b16 %v1841
  %v1946 = vunpack.c.l.b16 %v1842
  %v1947 = vunpack.c.l.b16 %v1843
  %v1948 = vunpack.c.l.b16 %v1844
  %v1949 = vunpack.c.l.b16 %v1845
  %v1950 = vunpack.c.l.b16 %v1846
  %v1951 = vpack.c.b16 %v1904, %v1903
  %v1952 = vpack.c.b16 %v1906, %v1905
  %v1953 = vpack.c.b16 %v1908, %v1907
  %v1954 = vpack.c.b16 %v1910, %v1909
  %v1955 = vpack.c.b16 %v1912, %v1911
  %v1956 = vpack.c.b16 %v1914, %v1913
  %v1957 = vpack.c.b16 %v1916, %v1915
  %v1958 = vpack.c.b16 %v1918, %v1917
  %v1959 = vpack.c.b16 %v1920, %v1919
  %v1960 = vpack.c.b16 %v1922, %v1921
  %v1961 = vpack.c.b16 %v1924, %v1923
  %v1962 = vpack.c.b16 %v1926, %v1925
  %v1963 = vpack.c.b16 %v1928, %v1927
  %v1964 = vpack.c.b16 %v1930, %v1929
  %v1965 = vpack.c.b16 %v1932, %v1931
  %v1966 = vpack.c.b16 %v1934, %v1933
  %v1967 = vpack.c.b16 %v1936, %v1935
  %v1968 = vpack.c.b16 %v1938, %v1937
  %v1969 = vpack.c.b16 %v1940, %v1939
  %v1970 = vpack.c.b16 %v1942, %v1941
  %v1971 = vpack.c.b16 %v1944, %v1943
  %v1972 = vpack.c.b16 %v1946, %v1945
  %v1973 = vpack.c.b16 %v1948, %v1947
  %v1974 = vpack.c.b16 %v1950, %v1949
  %1999 = vmatprep.subr.bf16.mxu0 0
  %2000 = vmatpush1.bf16.msra.mxu0 %v1958
  %2001 = vmatprep.subr.bf16.mxu0 0
  %2002 = vmatpush1.bf16.msra.mxu0 %v1957
  %2003 = vmatprep.subr.bf16.mxu0 0
  %2004 = vmatpush1.bf16.msra.mxu0 %v1956
  %2005 = vmatprep.subr.bf16.mxu0 0
  %2006 = vmatpush1.bf16.msra.mxu0 %v1955
  %2007 = vmatprep.subr.bf16.mxu0 0
  %2008 = vmatpush1.bf16.msra.mxu0 %v1954
  %2009 = vmatprep.subr.bf16.mxu0 0
  %2010 = vmatpush1.bf16.msra.mxu0 %v1953
  %2011 = vmatprep.subr.bf16.mxu0 0
  %2012 = vmatpush1.bf16.msra.mxu0 %v1952
  %2013 = vmatprep.subr.bf16.mxu0 0
  %2014 = vmatpush1.bf16.msra.mxu0 %v1951
  %2015 = vmatprep.subr.bf16.mxu0 0
  %2016 = vmatpush2.bf16.msra.mxu0 %v1966
  %2017 = vmatprep.subr.bf16.mxu0 0
  %2018 = vmatpush2.bf16.msra.mxu0 %v1965
  %2019 = vmatprep.subr.bf16.mxu0 0
  %2020 = vmatpush2.bf16.msra.mxu0 %v1964
  %2021 = vmatprep.subr.bf16.mxu0 0
  %2022 = vmatpush2.bf16.msra.mxu0 %v1963
  %2023 = vmatprep.subr.bf16.mxu0 0
  %2024 = vmatpush2.bf16.msra.mxu0 %v1962
  %2025 = vmatprep.subr.bf16.mxu0 0
  %2026 = vmatpush2.bf16.msra.mxu0 %v1961
  %2027 = vmatprep.subr.bf16.mxu0 0
  %2028 = vmatpush2.bf16.msra.mxu0 %v1960
  %2029 = vmatprep.subr.bf16.mxu0 0
  %2030 = vmatpush2.bf16.msra.mxu0 %v1959
  %2031 = vmatprep.mubr.bf16.mxu0 %v1787
  %2032 = vmatmul.mubr.bf16.gmra.mxu0 %v1786
  %v2033 = vpop.f32.mrf.mxu0
  %v2034 = vadd.f32 %v1853, %v2033
  %v2035 = vpop.f32.mrf.mxu0
  %v2036 = vpop.f32.mrf.mxu0
  %v2037 = vadd.f32 %v1853, %v2036
  %v2038 = vpop.f32.mrf.mxu0
  %2039 = vmatprep.mubr.bf16.mxu0 %v1790
  %2040 = vmatmul.mubr.bf16.gmra.mxu0 %v1789
  %v2041 = vpop.f32.mrf.mxu0
  %v2042 = vadd.f32 %v1853, %v2041
  %v2043 = vpop.f32.mrf.mxu0
  %v2044 = vpop.f32.mrf.mxu0
  %v2045 = vadd.f32 %v1853, %v2044
  %v2046 = vpop.f32.mrf.mxu0
  %2047 = vmatprep.mubr.bf16.mxu0 %v1793
  %2048 = vmatmul.mubr.bf16.gmra.mxu0 %v1792
  %v2049 = vpop.f32.mrf.mxu0
  %v2050 = vadd.f32 %v1853, %v2049
  %v2051 = vpop.f32.mrf.mxu0
  %v2052 = vpop.f32.mrf.mxu0
  %v2053 = vadd.f32 %v1853, %v2052
  %v2054 = vpop.f32.mrf.mxu0
  %2055 = vmatprep.mubr.bf16.mxu0 %v1796
  %2056 = vmatmul.mubr.bf16.gmra.mxu0 %v1795
  %v2057 = vpop.f32.mrf.mxu0
  %v2058 = vadd.f32 %v1853, %v2057
  %v2059 = vpop.f32.mrf.mxu0
  %v2060 = vpop.f32.mrf.mxu0
  %v2061 = vadd.f32 %v1853, %v2060
  %v2062 = vpop.f32.mrf.mxu0
  %2063 = vdwg.mxu0
  %2064 = vmatprep.subr.bf16.mxu0 0
  %2065 = vmatpush1.bf16.msra.mxu0 %v1974
  %2066 = vmatprep.subr.bf16.mxu0 0
  %2067 = vmatpush1.bf16.msra.mxu0 %v1973
  %2068 = vmatprep.subr.bf16.mxu0 0
  %2069 = vmatpush1.bf16.msra.mxu0 %v1972
  %2070 = vmatprep.subr.bf16.mxu0 0
  %2071 = vmatpush1.bf16.msra.mxu0 %v1971
  %2072 = vmatprep.subr.bf16.mxu0 0
  %2073 = vmatpush1.bf16.msra.mxu0 %v1970
  %2074 = vmatprep.subr.bf16.mxu0 0
  %2075 = vmatpush1.bf16.msra.mxu0 %v1969
  %2076 = vmatprep.subr.bf16.mxu0 0
  %2077 = vmatpush1.bf16.msra.mxu0 %v1968
  %2078 = vmatprep.subr.bf16.mxu0 0
  %2079 = vmatpush1.bf16.msra.mxu0 %v1967
  %2080 = vmatprep.subr.bf16.mxu0 0
  %2081 = vmatpush2.bf16.msra.mxu0 0
  %2082 = vmatprep.subr.bf16.mxu0 0
  %2083 = vmatpush2.bf16.msra.mxu0 0
  %2084 = vmatprep.subr.bf16.mxu0 0
  %2085 = vmatpush2.bf16.msra.mxu0 0
  %2086 = vmatprep.subr.bf16.mxu0 0
  %2087 = vmatpush2.bf16.msra.mxu0 0
  %2088 = vmatprep.subr.bf16.mxu0 0
  %2089 = vmatpush2.bf16.msra.mxu0 0
  %2090 = vmatprep.subr.bf16.mxu0 0
  %2091 = vmatpush2.bf16.msra.mxu0 0
  %2092 = vmatprep.subr.bf16.mxu0 0
  %2093 = vmatpush2.bf16.msra.mxu0 0
  %2094 = vmatprep.subr.bf16.mxu0 0
  %2095 = vmatpush2.bf16.msra.mxu0 0
  %2096 = vmatprep.mubr.bf16.mxu0 0
  %2097 = vmatmul.mubr.bf16.gmra.mxu0 %v1788
  %v2098 = vpop.f32.mrf.mxu0
  %v2099 = vadd.f32 %v2034, %v2098
  %v2100 = vpop.f32.mrf.mxu0
  %v2101 = vpop.f32.mrf.mxu0
  %v2102 = vadd.f32 %v2037, %v2101
  %v2103 = vpop.f32.mrf.mxu0
  %2104 = vmatprep.mubr.bf16.mxu0 0
  %2105 = vmatmul.mubr.bf16.gmra.mxu0 %v1791
  %v2106 = vpop.f32.mrf.mxu0
  %v2107 = vadd.f32 %v2042, %v2106
  %v2108 = vpop.f32.mrf.mxu0
  %v2109 = vpop.f32.mrf.mxu0
  %v2110 = vadd.f32 %v2045, %v2109
  %v2111 = vpop.f32.mrf.mxu0
  %2112 = vmatprep.mubr.bf16.mxu0 0
  %2113 = vmatmul.mubr.bf16.gmra.mxu0 %v1794
  %v2114 = vpop.f32.mrf.mxu0
  %v2115 = vadd.f32 %v2050, %v2114
  %v2116 = vpop.f32.mrf.mxu0
  %v2117 = vpop.f32.mrf.mxu0
  %v2118 = vadd.f32 %v2053, %v2117
  %v2119 = vpop.f32.mrf.mxu0
  %2120 = vmatprep.mubr.bf16.mxu0 0
  %2121 = vmatmul.mubr.bf16.gmra.mxu0 %v1797
  %v2122 = vpop.f32.mrf.mxu0
  %v2123 = vadd.f32 %v2058, %v2122
  %v2124 = vpop.f32.mrf.mxu0
  %v2125 = vpop.f32.mrf.mxu0
  %v2126 = vadd.f32 %v2061, %v2125
  %v2127 = vpop.f32.mrf.mxu0
  %2128 = vdwg.mxu0
  %v2129 = vmax.f32 %v2099, 0.0
  %v2130 = vmax.f32 %v2102, 0.0
  %v2131 = vmax.f32 %v2107, 0.0
  %v2132 = vmax.f32 %v2110, 0.0
  %v2133 = vmax.f32 %v2115, 0.0
  %v2134 = vmax.f32 %v2118, 0.0
  %v2135 = vmax.f32 %v2123, 0.0
  %v2136 = vmax.f32 %v2126, 0.0
  %v2137 = vrot.slane %v2129, 7
  %v2138 = vrot.slane %v2130, 7
  %v2139 = vrot.slane %v2131, 7
  %v2140 = vrot.slane %v2132, 7
  %v2141 = vrot.slane %v2133, 7
  %v2142 = vrot.slane %v2134, 7
  %v2143 = vrot.slane %v2135, 7
  %v2144 = vrot.slane %v2136, 7
  %v2145 = vsel %vm165, %v2143, %v2144
  %v2146 = vsel %vm165, %v2142, %v2143
  %v2147 = vsel %vm165, %v2141, %v2142
  %v2148 = vsel %vm165, %v2140, %v2141
  %v2149 = vsel %vm165, %v2139, %v2140
  %v2150 = vsel %vm165, %v2138, %v2139
  %v2151 = vsel %vm165, %v2137, %v2138
  %v2152 = vsel %vm165, %v2144, %v2137
  %v2153 = vsel %vm139, 0.0, %v2152
  %v2154 = vsel %vm140, 0.0, %v2151
  %v2155 = vsel %vm141, 0.0, %v2150
  %v2156 = vsel %vm142, 0.0, %v2149
  %v2157 = vsel %vm143, 0.0, %v2148
  %v2158 = vsel %vm144, 0.0, %v2147
  %v2159 = vsel %vm145, 0.0, %v2146
  %v2160 = vsel %vm146, 0.0, %v2145
  %v2161 = vrot.slane %v2129, 1
  %v2162 = vrot.slane %v2130, 1
  %v2163 = vrot.slane %v2131, 1
  %v2164 = vrot.slane %v2132, 1
  %v2165 = vrot.slane %v2133, 1
  %v2166 = vrot.slane %v2134, 1
  %v2167 = vrot.slane %v2135, 1
  %v2168 = vrot.slane %v2136, 1
  %v2169 = vsel %vm190, %v2167, %v2168
  %v2170 = vsel %vm190, %v2166, %v2167
  %v2171 = vsel %vm190, %v2165, %v2166
  %v2172 = vsel %vm190, %v2164, %v2165
  %v2173 = vsel %vm190, %v2163, %v2164
  %v2174 = vsel %vm190, %v2162, %v2163
  %v2175 = vsel %vm190, %v2161, %v2162
  %v2176 = vsel %vm190, %v2168, %v2161
  %v2177 = vsel %vm147, 0.0, %v2175
  %v2178 = vsel %vm148, 0.0, %v2174
  %v2179 = vsel %vm149, 0.0, %v2173
  %v2180 = vsel %vm150, 0.0, %v2172
  %v2181 = vsel %vm151, 0.0, %v2171
  %v2182 = vsel %vm152, 0.0, %v2170
  %v2183 = vsel %vm153, 0.0, %v2169
  %v2184 = vsel %vm154, 0.0, %v2176
  %v2185 = vpack.c.bf16 %v2154, %v2153
  %v2186 = vpack.c.bf16 %v2130, %v2129
  %v2187 = vpack.c.bf16 %v2178, %v2177
  %v2188 = vpack.c.bf16 %v2156, %v2155
  %v2189 = vpack.c.bf16 %v2132, %v2131
  %v2190 = vpack.c.bf16 %v2180, %v2179
  %v2191 = vpack.c.bf16 %v2158, %v2157
  %v2192 = vpack.c.bf16 %v2134, %v2133
  %v2193 = vpack.c.bf16 %v2182, %v2181
  %v2194 = vpack.c.bf16 %v2160, %v2159
  %v2195 = vpack.c.bf16 %v2136, %v2135
  %v2196 = vpack.c.bf16 %v2184, %v2183
  %s2197 = scalar_lea.vmem %s1, 768
  %v2198 = vld [vmem:[%s2197] sm:$0xf]
  %v2199 = vld [vmem:[%s2197 + $0x4] sm:$0xf]
  %v2200 = vld [vmem:[%s2197 + $0x8] sm:$0xf]
  %v2201 = vld [vmem:[%s2197 + $0xc] sm:$0xf]
  %v2202 = vld [vmem:[%s2197 + $0x10] sm:$0xf]
  %v2203 = vld [vmem:[%s2197 + $0x14] sm:$0xf]
  %v2204 = vld [vmem:[%s2197 + $0x18] sm:$0xf]
  %v2205 = vld [vmem:[%s2197 + $0x1c] sm:$0xf]
  %v2206 = vld [vmem:[%s2197 + $0x20] sm:$0xf]
  %v2207 = vld [vmem:[%s2197 + $0x24] sm:$0xf]
  %v2208 = vld [vmem:[%s2197 + $0x28] sm:$0xf]
  %v2209 = vld [vmem:[%s2197 + $0x2c] sm:$0xf]
  %v2210 = vld [vmem:[%s2197 + $0x30] sm:$0xf]
  %v2211 = vld [vmem:[%s2197 + $0x34] sm:$0xf]
  %v2212 = vld [vmem:[%s2197 + $0x38] sm:$0xf]
  %v2213 = vld [vmem:[%s2197 + $0x3c] sm:$0xf]
  %v2214 = vld [vmem:[%s2197 + $0x40] sm:$0xf]
  %v2215 = vld [vmem:[%s2197 + $0x44] sm:$0xf]
  %v2216 = vld [vmem:[%s2197 + $0x48] sm:$0xf]
  %v2217 = vld [vmem:[%s2197 + $0x4c] sm:$0xf]
  %v2218 = vld [vmem:[%s2197 + $0x50] sm:$0xf]
  %v2219 = vld [vmem:[%s2197 + $0x54] sm:$0xf]
  %v2220 = vld [vmem:[%s2197 + $0x58] sm:$0xf]
  %v2221 = vld [vmem:[%s2197 + $0x5c] sm:$0xf]
  %v2222 = vld [vmem:[%s2197 + $0x60] sm:$0xf]
  %v2223 = vld [vmem:[%s2197 + $0x64] sm:$0xf]
  %v2224 = vld [vmem:[%s2197 + $0x68] sm:$0xf]
  %v2225 = vld [vmem:[%s2197 + $0x6c] sm:$0xf]
  %v2226 = vld [vmem:[%s2197 + $0x70] sm:$0xf]
  %v2227 = vld [vmem:[%s2197 + $0x74] sm:$0xf]
  %v2228 = vld [vmem:[%s2197 + $0x78] sm:$0xf]
  %v2229 = vld [vmem:[%s2197 + $0x7c] sm:$0xf]
  %v2230 = vld [vmem:[%s2197 + $0x80] sm:$0xf]
  %v2231 = vld [vmem:[%s2197 + $0x84] sm:$0xf]
  %v2232 = vld [vmem:[%s2197 + $0x88] sm:$0xf]
  %v2233 = vld [vmem:[%s2197 + $0x8c] sm:$0xf]
  %v2234 = vld [vmem:[%s2197 + $0x90] sm:$0xf]
  %v2235 = vld [vmem:[%s2197 + $0x94] sm:$0xf]
  %v2236 = vld [vmem:[%s2197 + $0x98] sm:$0xf]
  %v2237 = vld [vmem:[%s2197 + $0x9c] sm:$0xf]
  %v2238 = vld [vmem:[%s2197 + $0xa0] sm:$0xf]
  %v2239 = vld [vmem:[%s2197 + $0xa4] sm:$0xf]
  %v2240 = vld [vmem:[%s2197 + $0xa8] sm:$0xf]
  %v2241 = vld [vmem:[%s2197 + $0xac] sm:$0xf]
  %v2242 = vld [vmem:[%s2197 + $0xb0] sm:$0xf]
  %v2243 = vld [vmem:[%s2197 + $0xb4] sm:$0xf]
  %v2244 = vld [vmem:[%s2197 + $0xb8] sm:$0xf]
  %v2245 = vld [vmem:[%s2197 + $0xbc] sm:$0xf]
  %s2246 = scalar_lea.vmem %s2, 4
  %v2247 = vld [vmem:[%s2246] sm:$0x1]
  %v2249 = vlaneseq
  %v2250 = vshrl.u32 %v2249, 7
  %v2251 = vsub.s32 0, %v2250
  %v2252 = vrot.slane %v2247, %v2251
  %v2302 = vunpack.c.l.b16 %v2198
  %v2303 = vunpack.c.l.b16 %v2199
  %v2304 = vunpack.c.l.b16 %v2200
  %v2305 = vunpack.c.l.b16 %v2201
  %v2306 = vunpack.c.l.b16 %v2202
  %v2307 = vunpack.c.l.b16 %v2203
  %v2308 = vunpack.c.l.b16 %v2204
  %v2309 = vunpack.c.l.b16 %v2205
  %v2310 = vunpack.c.l.b16 %v2206
  %v2311 = vunpack.c.l.b16 %v2207
  %v2312 = vunpack.c.l.b16 %v2208
  %v2313 = vunpack.c.l.b16 %v2209
  %v2314 = vunpack.c.l.b16 %v2210
  %v2315 = vunpack.c.l.b16 %v2211
  %v2316 = vunpack.c.l.b16 %v2212
  %v2317 = vunpack.c.l.b16 %v2213
  %v2318 = vunpack.c.l.b16 %v2214
  %v2319 = vunpack.c.l.b16 %v2215
  %v2320 = vunpack.c.l.b16 %v2216
  %v2321 = vunpack.c.l.b16 %v2217
  %v2322 = vunpack.c.l.b16 %v2218
  %v2323 = vunpack.c.l.b16 %v2219
  %v2324 = vunpack.c.l.b16 %v2220
  %v2325 = vunpack.c.l.b16 %v2221
  %v2326 = vunpack.c.l.b16 %v2222
  %v2327 = vunpack.c.l.b16 %v2223
  %v2328 = vunpack.c.l.b16 %v2224
  %v2329 = vunpack.c.l.b16 %v2225
  %v2330 = vunpack.c.l.b16 %v2226
  %v2331 = vunpack.c.l.b16 %v2227
  %v2332 = vunpack.c.l.b16 %v2228
  %v2333 = vunpack.c.l.b16 %v2229
  %v2334 = vunpack.c.l.b16 %v2230
  %v2335 = vunpack.c.l.b16 %v2231
  %v2336 = vunpack.c.l.b16 %v2232
  %v2337 = vunpack.c.l.b16 %v2233
  %v2338 = vunpack.c.l.b16 %v2234
  %v2339 = vunpack.c.l.b16 %v2235
  %v2340 = vunpack.c.l.b16 %v2236
  %v2341 = vunpack.c.l.b16 %v2237
  %v2342 = vunpack.c.l.b16 %v2238
  %v2343 = vunpack.c.l.b16 %v2239
  %v2344 = vunpack.c.l.b16 %v2240
  %v2345 = vunpack.c.l.b16 %v2241
  %v2346 = vunpack.c.l.b16 %v2242
  %v2347 = vunpack.c.l.b16 %v2243
  %v2348 = vunpack.c.l.b16 %v2244
  %v2349 = vunpack.c.l.b16 %v2245
  %v2350 = vpack.c.b16 %v2303, %v2302
  %v2351 = vpack.c.b16 %v2305, %v2304
  %v2352 = vpack.c.b16 %v2307, %v2306
  %v2353 = vpack.c.b16 %v2309, %v2308
  %v2354 = vpack.c.b16 %v2311, %v2310
  %v2355 = vpack.c.b16 %v2313, %v2312
  %v2356 = vpack.c.b16 %v2315, %v2314
  %v2357 = vpack.c.b16 %v2317, %v2316
  %v2358 = vpack.c.b16 %v2319, %v2318
  %v2359 = vpack.c.b16 %v2321, %v2320
  %v2360 = vpack.c.b16 %v2323, %v2322
  %v2361 = vpack.c.b16 %v2325, %v2324
  %v2362 = vpack.c.b16 %v2327, %v2326
  %v2363 = vpack.c.b16 %v2329, %v2328
  %v2364 = vpack.c.b16 %v2331, %v2330
  %v2365 = vpack.c.b16 %v2333, %v2332
  %v2366 = vpack.c.b16 %v2335, %v2334
  %v2367 = vpack.c.b16 %v2337, %v2336
  %v2368 = vpack.c.b16 %v2339, %v2338
  %v2369 = vpack.c.b16 %v2341, %v2340
  %v2370 = vpack.c.b16 %v2343, %v2342
  %v2371 = vpack.c.b16 %v2345, %v2344
  %v2372 = vpack.c.b16 %v2347, %v2346
  %v2373 = vpack.c.b16 %v2349, %v2348
  %2398 = vmatprep.subr.bf16.mxu0 0
  %2399 = vmatpush1.bf16.msra.mxu0 %v2357
  %2400 = vmatprep.subr.bf16.mxu0 0
  %2401 = vmatpush1.bf16.msra.mxu0 %v2356
  %2402 = vmatprep.subr.bf16.mxu0 0
  %2403 = vmatpush1.bf16.msra.mxu0 %v2355
  %2404 = vmatprep.subr.bf16.mxu0 0
  %2405 = vmatpush1.bf16.msra.mxu0 %v2354
  %2406 = vmatprep.subr.bf16.mxu0 0
  %2407 = vmatpush1.bf16.msra.mxu0 %v2353
  %2408 = vmatprep.subr.bf16.mxu0 0
  %2409 = vmatpush1.bf16.msra.mxu0 %v2352
  %2410 = vmatprep.subr.bf16.mxu0 0
  %2411 = vmatpush1.bf16.msra.mxu0 %v2351
  %2412 = vmatprep.subr.bf16.mxu0 0
  %2413 = vmatpush1.bf16.msra.mxu0 %v2350
  %2414 = vmatprep.subr.bf16.mxu0 0
  %2415 = vmatpush2.bf16.msra.mxu0 %v2365
  %2416 = vmatprep.subr.bf16.mxu0 0
  %2417 = vmatpush2.bf16.msra.mxu0 %v2364
  %2418 = vmatprep.subr.bf16.mxu0 0
  %2419 = vmatpush2.bf16.msra.mxu0 %v2363
  %2420 = vmatprep.subr.bf16.mxu0 0
  %2421 = vmatpush2.bf16.msra.mxu0 %v2362
  %2422 = vmatprep.subr.bf16.mxu0 0
  %2423 = vmatpush2.bf16.msra.mxu0 %v2361
  %2424 = vmatprep.subr.bf16.mxu0 0
  %2425 = vmatpush2.bf16.msra.mxu0 %v2360
  %2426 = vmatprep.subr.bf16.mxu0 0
  %2427 = vmatpush2.bf16.msra.mxu0 %v2359
  %2428 = vmatprep.subr.bf16.mxu0 0
  %2429 = vmatpush2.bf16.msra.mxu0 %v2358
  %2430 = vmatprep.mubr.bf16.mxu0 %v2186
  %2431 = vmatmul.mubr.bf16.gmra.mxu0 %v2185
  %v2432 = vpop.f32.mrf.mxu0
  %v2433 = vadd.f32 %v2252, %v2432
  %v2434 = vpop.f32.mrf.mxu0
  %v2435 = vpop.f32.mrf.mxu0
  %v2436 = vadd.f32 %v2252, %v2435
  %v2437 = vpop.f32.mrf.mxu0
  %2438 = vmatprep.mubr.bf16.mxu0 %v2189
  %2439 = vmatmul.mubr.bf16.gmra.mxu0 %v2188
  %v2440 = vpop.f32.mrf.mxu0
  %v2441 = vadd.f32 %v2252, %v2440
  %v2442 = vpop.f32.mrf.mxu0
  %v2443 = vpop.f32.mrf.mxu0
  %v2444 = vadd.f32 %v2252, %v2443
  %v2445 = vpop.f32.mrf.mxu0
  %2446 = vmatprep.mubr.bf16.mxu0 %v2192
  %2447 = vmatmul.mubr.bf16.gmra.mxu0 %v2191
  %v2448 = vpop.f32.mrf.mxu0
  %v2449 = vadd.f32 %v2252, %v2448
  %v2450 = vpop.f32.mrf.mxu0
  %v2451 = vpop.f32.mrf.mxu0
  %v2452 = vadd.f32 %v2252, %v2451
  %v2453 = vpop.f32.mrf.mxu0
  %2454 = vmatprep.mubr.bf16.mxu0 %v2195
  %2455 = vmatmul.mubr.bf16.gmra.mxu0 %v2194
  %v2456 = vpop.f32.mrf.mxu0
  %v2457 = vadd.f32 %v2252, %v2456
  %v2458 = vpop.f32.mrf.mxu0
  %v2459 = vpop.f32.mrf.mxu0
  %v2460 = vadd.f32 %v2252, %v2459
  %v2461 = vpop.f32.mrf.mxu0
  %2462 = vdwg.mxu0
  %2463 = vmatprep.subr.bf16.mxu0 0
  %2464 = vmatpush1.bf16.msra.mxu0 %v2373
  %2465 = vmatprep.subr.bf16.mxu0 0
  %2466 = vmatpush1.bf16.msra.mxu0 %v2372
  %2467 = vmatprep.subr.bf16.mxu0 0
  %2468 = vmatpush1.bf16.msra.mxu0 %v2371
  %2469 = vmatprep.subr.bf16.mxu0 0
  %2470 = vmatpush1.bf16.msra.mxu0 %v2370
  %2471 = vmatprep.subr.bf16.mxu0 0
  %2472 = vmatpush1.bf16.msra.mxu0 %v2369
  %2473 = vmatprep.subr.bf16.mxu0 0
  %2474 = vmatpush1.bf16.msra.mxu0 %v2368
  %2475 = vmatprep.subr.bf16.mxu0 0
  %2476 = vmatpush1.bf16.msra.mxu0 %v2367
  %2477 = vmatprep.subr.bf16.mxu0 0
  %2478 = vmatpush1.bf16.msra.mxu0 %v2366
  %2479 = vmatprep.subr.bf16.mxu0 0
  %2480 = vmatpush2.bf16.msra.mxu0 0
  %2481 = vmatprep.subr.bf16.mxu0 0
  %2482 = vmatpush2.bf16.msra.mxu0 0
  %2483 = vmatprep.subr.bf16.mxu0 0
  %2484 = vmatpush2.bf16.msra.mxu0 0
  %2485 = vmatprep.subr.bf16.mxu0 0
  %2486 = vmatpush2.bf16.msra.mxu0 0
  %2487 = vmatprep.subr.bf16.mxu0 0
  %2488 = vmatpush2.bf16.msra.mxu0 0
  %2489 = vmatprep.subr.bf16.mxu0 0
  %2490 = vmatpush2.bf16.msra.mxu0 0
  %2491 = vmatprep.subr.bf16.mxu0 0
  %2492 = vmatpush2.bf16.msra.mxu0 0
  %2493 = vmatprep.subr.bf16.mxu0 0
  %2494 = vmatpush2.bf16.msra.mxu0 0
  %2495 = vmatprep.mubr.bf16.mxu0 0
  %2496 = vmatmul.mubr.bf16.gmra.mxu0 %v2187
  %v2497 = vpop.f32.mrf.mxu0
  %v2498 = vadd.f32 %v2433, %v2497
  %v2499 = vpop.f32.mrf.mxu0
  %v2500 = vpop.f32.mrf.mxu0
  %v2501 = vadd.f32 %v2436, %v2500
  %v2502 = vpop.f32.mrf.mxu0
  %2503 = vmatprep.mubr.bf16.mxu0 0
  %2504 = vmatmul.mubr.bf16.gmra.mxu0 %v2190
  %v2505 = vpop.f32.mrf.mxu0
  %v2506 = vadd.f32 %v2441, %v2505
  %v2507 = vpop.f32.mrf.mxu0
  %v2508 = vpop.f32.mrf.mxu0
  %v2509 = vadd.f32 %v2444, %v2508
  %v2510 = vpop.f32.mrf.mxu0
  %2511 = vmatprep.mubr.bf16.mxu0 0
  %2512 = vmatmul.mubr.bf16.gmra.mxu0 %v2193
  %v2513 = vpop.f32.mrf.mxu0
  %v2514 = vadd.f32 %v2449, %v2513
  %v2515 = vpop.f32.mrf.mxu0
  %v2516 = vpop.f32.mrf.mxu0
  %v2517 = vadd.f32 %v2452, %v2516
  %v2518 = vpop.f32.mrf.mxu0
  %2519 = vmatprep.mubr.bf16.mxu0 0
  %2520 = vmatmul.mubr.bf16.gmra.mxu0 %v2196
  %v2521 = vpop.f32.mrf.mxu0
  %v2522 = vadd.f32 %v2457, %v2521
  %v2523 = vpop.f32.mrf.mxu0
  %v2524 = vpop.f32.mrf.mxu0
  %v2525 = vadd.f32 %v2460, %v2524
  %v2526 = vpop.f32.mrf.mxu0
  %2527 = vdwg.mxu0
  %v2528 = vmax.f32 %v2498, 0.0
  %v2529 = vmax.f32 %v2501, 0.0
  %v2530 = vmax.f32 %v2506, 0.0
  %v2531 = vmax.f32 %v2509, 0.0
  %v2532 = vmax.f32 %v2514, 0.0
  %v2533 = vmax.f32 %v2517, 0.0
  %v2534 = vmax.f32 %v2522, 0.0
  %v2535 = vmax.f32 %v2525, 0.0
  %v2536 = vmul.f32 %v1354, %v2129
  %v2537 = vmul.f32 %v1355, %v2130
  %v2538 = vmul.f32 %v1356, %v2131
  %v2539 = vmul.f32 %v1357, %v2132
  %v2540 = vmul.f32 %v1358, %v2133
  %v2541 = vmul.f32 %v1359, %v2134
  %v2542 = vmul.f32 %v1360, %v2135
  %v2543 = vmul.f32 %v1361, %v2136
  %v2544 = vmul.f32 %v1354, %v1354
  %v2545 = vmul.f32 %v1355, %v1355
  %v2546 = vmul.f32 %v1356, %v1356
  %v2547 = vmul.f32 %v1357, %v1357
  %v2548 = vmul.f32 %v1358, %v1358
  %v2549 = vmul.f32 %v1359, %v1359
  %v2550 = vmul.f32 %v1360, %v1360
  %v2551 = vmul.f32 %v1361, %v1361
  %v2552 = vmul.f32 %v2129, %v2129
  %v2553 = vmul.f32 %v2130, %v2130
  %v2554 = vmul.f32 %v2131, %v2131
  %v2555 = vmul.f32 %v2132, %v2132
  %v2556 = vmul.f32 %v2133, %v2133
  %v2557 = vmul.f32 %v2134, %v2134
  %v2558 = vmul.f32 %v2135, %v2135
  %v2559 = vmul.f32 %v2136, %v2136
  %v2560 = vld [vmem:[%s3] sm:$0xff]
  %v2561 = vld [vmem:[%s3 + $0x8] sm:$0xff]
  %v2562 = vld [vmem:[%s3 + $0x10] sm:$0xff]
  %v2563 = vld [vmem:[%s3 + $0x18] sm:$0xff]
  %v2564 = vld [vmem:[%s3 + $0x20] sm:$0xff]
  %v2565 = vld [vmem:[%s3 + $0x28] sm:$0xff]
  %v2566 = vld [vmem:[%s3 + $0x30] sm:$0xff]
  %v2567 = vld [vmem:[%s3 + $0x38] sm:$0xff]
  %v2568 = vld [vmem:[%s3 + $0x40] sm:$0xff]
  %v2569 = vld [vmem:[%s3 + $0x48] sm:$0xff]
  %v2570 = vld [vmem:[%s3 + $0x50] sm:$0xff]
  %v2571 = vld [vmem:[%s3 + $0x58] sm:$0xff]
  %v2572 = vld [vmem:[%s3 + $0x60] sm:$0xff]
  %v2573 = vld [vmem:[%s3 + $0x68] sm:$0xff]
  %v2574 = vld [vmem:[%s3 + $0x70] sm:$0xff]
  %v2575 = vld [vmem:[%s3 + $0x78] sm:$0xff]
  %2576 = vmatprep.subr.mxu0 0.0
  %2577 = vmatpush1.msra.mxu0 %v2575
  %2578 = vmatprep.subr.mxu0 0.0
  %2579 = vmatpush1.msra.mxu0 %v2574
  %2580 = vmatprep.subr.mxu0 0.0
  %2581 = vmatpush1.msra.mxu0 %v2573
  %2582 = vmatprep.subr.mxu0 0.0
  %2583 = vmatpush1.msra.mxu0 %v2572
  %2584 = vmatprep.subr.mxu0 0.0
  %2585 = vmatpush1.msra.mxu0 %v2571
  %2586 = vmatprep.subr.mxu0 0.0
  %2587 = vmatpush1.msra.mxu0 %v2570
  %2588 = vmatprep.subr.mxu0 0.0
  %2589 = vmatpush1.msra.mxu0 %v2569
  %2590 = vmatprep.subr.mxu0 0.0
  %2591 = vmatpush1.msra.mxu0 %v2568
  %2592 = vmatprep.subr.mxu0 0.0
  %2593 = vmatpush1.msra.mxu0 %v2567
  %2594 = vmatprep.subr.mxu0 0.0
  %2595 = vmatpush1.msra.mxu0 %v2566
  %2596 = vmatprep.subr.mxu0 0.0
  %2597 = vmatpush1.msra.mxu0 %v2565
  %2598 = vmatprep.subr.mxu0 0.0
  %2599 = vmatpush1.msra.mxu0 %v2564
  %2600 = vmatprep.subr.mxu0 0.0
  %2601 = vmatpush1.msra.mxu0 %v2563
  %2602 = vmatprep.subr.mxu0 0.0
  %2603 = vmatpush1.msra.mxu0 %v2562
  %2604 = vmatprep.subr.mxu0 0.0
  %2605 = vmatpush1.msra.mxu0 %v2561
  %2606 = vmatprep.subr.mxu0 0.0
  %2607 = vmatpush1.msra.mxu0 %v2560
  %2608 = vmatprep.subr.mxu0 0.0
  %2609 = vmatpush2.msra.mxu0 0.0
  %2610 = vmatprep.subr.mxu0 0.0
  %2611 = vmatpush2.msra.mxu0 0.0
  %2612 = vmatprep.subr.mxu0 0.0
  %2613 = vmatpush2.msra.mxu0 0.0
  %2614 = vmatprep.subr.mxu0 0.0
  %2615 = vmatpush2.msra.mxu0 0.0
  %2616 = vmatprep.subr.mxu0 0.0
  %2617 = vmatpush2.msra.mxu0 0.0
  %2618 = vmatprep.subr.mxu0 0.0
  %2619 = vmatpush2.msra.mxu0 0.0
  %2620 = vmatprep.subr.mxu0 0.0
  %2621 = vmatpush2.msra.mxu0 0.0
  %2622 = vmatprep.subr.mxu0 0.0
  %2623 = vmatpush2.msra.mxu0 0.0
  %2624 = vmatprep.subr.mxu0 0.0
  %2625 = vmatpush2.msra.mxu0 0.0
  %2626 = vmatprep.subr.mxu0 0.0
  %2627 = vmatpush2.msra.mxu0 0.0
  %2628 = vmatprep.subr.mxu0 0.0
  %2629 = vmatpush2.msra.mxu0 0.0
  %2630 = vmatprep.subr.mxu0 0.0
  %2631 = vmatpush2.msra.mxu0 0.0
  %2632 = vmatprep.subr.mxu0 0.0
  %2633 = vmatpush2.msra.mxu0 0.0
  %2634 = vmatprep.subr.mxu0 0.0
  %2635 = vmatpush2.msra.mxu0 0.0
  %2636 = vmatprep.subr.mxu0 0.0
  %2637 = vmatpush2.msra.mxu0 0.0
  %2638 = vmatprep.subr.mxu0 0.0
  %2639 = vmatpush2.msra.mxu0 0.0
  %2640 = vmatprep.mubr.f32.mxu0 0.0
  %2641 = vmatmul.mubr.f32.gmra.mxu0 %v2536
  %v2642 = vpop.f32.mrf.mxu0
  %v2643 = vadd.f32 0.0, %v2642
  %v2644 = vpop.f32.mrf.mxu0
  %2645 = vmatprep.mubr.f32.mxu0 0.0
  %2646 = vmatmul.mubr.f32.gmra.mxu0 %v2537
  %v2647 = vpop.f32.mrf.mxu0
  %v2648 = vadd.f32 0.0, %v2647
  %v2649 = vpop.f32.mrf.mxu0
  %2650 = vmatprep.mubr.f32.mxu0 0.0
  %2651 = vmatmul.mubr.f32.gmra.mxu0 %v2538
  %v2652 = vpop.f32.mrf.mxu0
  %v2653 = vadd.f32 0.0, %v2652
  %v2654 = vpop.f32.mrf.mxu0
  %2655 = vmatprep.mubr.f32.mxu0 0.0
  %2656 = vmatmul.mubr.f32.gmra.mxu0 %v2539
  %v2657 = vpop.f32.mrf.mxu0
  %v2658 = vadd.f32 0.0, %v2657
  %v2659 = vpop.f32.mrf.mxu0
  %2660 = vmatprep.mubr.f32.mxu0 0.0
  %2661 = vmatmul.mubr.f32.gmra.mxu0 %v2540
  %v2662 = vpop.f32.mrf.mxu0
  %v2663 = vadd.f32 0.0, %v2662
  %v2664 = vpop.f32.mrf.mxu0
  %2665 = vmatprep.mubr.f32.mxu0 0.0
  %2666 = vmatmul.mubr.f32.gmra.mxu0 %v2541
  %v2667 = vpop.f32.mrf.mxu0
  %v2668 = vadd.f32 0.0, %v2667
  %v2669 = vpop.f32.mrf.mxu0
  %2670 = vmatprep.mubr.f32.mxu0 0.0
  %2671 = vmatmul.mubr.f32.gmra.mxu0 %v2542
  %v2672 = vpop.f32.mrf.mxu0
  %v2673 = vadd.f32 0.0, %v2672
  %v2674 = vpop.f32.mrf.mxu0
  %2675 = vmatprep.mubr.f32.mxu0 0.0
  %2676 = vmatmul.mubr.f32.gmra.mxu0 %v2543
  %v2677 = vpop.f32.mrf.mxu0
  %v2678 = vadd.f32 0.0, %v2677
  %v2679 = vpop.f32.mrf.mxu0
  %2680 = vmatprep.mubr.f32.mxu0 0.0
  %2681 = vmatmul.mubr.f32.gmra.mxu0 %v2544
  %v2682 = vpop.f32.mrf.mxu0
  %v2683 = vadd.f32 0.0, %v2682
  %v2684 = vpop.f32.mrf.mxu0
  %2685 = vmatprep.mubr.f32.mxu0 0.0
  %2686 = vmatmul.mubr.f32.gmra.mxu0 %v2545
  %v2687 = vpop.f32.mrf.mxu0
  %v2688 = vadd.f32 0.0, %v2687
  %v2689 = vpop.f32.mrf.mxu0
  %2690 = vmatprep.mubr.f32.mxu0 0.0
  %2691 = vmatmul.mubr.f32.gmra.mxu0 %v2546
  %v2692 = vpop.f32.mrf.mxu0
  %v2693 = vadd.f32 0.0, %v2692
  %v2694 = vpop.f32.mrf.mxu0
  %2695 = vmatprep.mubr.f32.mxu0 0.0
  %2696 = vmatmul.mubr.f32.gmra.mxu0 %v2547
  %v2697 = vpop.f32.mrf.mxu0
  %v2698 = vadd.f32 0.0, %v2697
  %v2699 = vpop.f32.mrf.mxu0
  %2700 = vmatprep.mubr.f32.mxu0 0.0
  %2701 = vmatmul.mubr.f32.gmra.mxu0 %v2548
  %v2702 = vpop.f32.mrf.mxu0
  %v2703 = vadd.f32 0.0, %v2702
  %v2704 = vpop.f32.mrf.mxu0
  %2705 = vmatprep.mubr.f32.mxu0 0.0
  %2706 = vmatmul.mubr.f32.gmra.mxu0 %v2549
  %v2707 = vpop.f32.mrf.mxu0
  %v2708 = vadd.f32 0.0, %v2707
  %v2709 = vpop.f32.mrf.mxu0
  %2710 = vmatprep.mubr.f32.mxu0 0.0
  %2711 = vmatmul.mubr.f32.gmra.mxu0 %v2550
  %v2712 = vpop.f32.mrf.mxu0
  %v2713 = vadd.f32 0.0, %v2712
  %v2714 = vpop.f32.mrf.mxu0
  %2715 = vmatprep.mubr.f32.mxu0 0.0
  %2716 = vmatmul.mubr.f32.gmra.mxu0 %v2551
  %v2717 = vpop.f32.mrf.mxu0
  %v2718 = vadd.f32 0.0, %v2717
  %v2719 = vpop.f32.mrf.mxu0
  %2720 = vmatprep.mubr.f32.mxu0 0.0
  %2721 = vmatmul.mubr.f32.gmra.mxu0 %v2552
  %v2722 = vpop.f32.mrf.mxu0
  %v2723 = vadd.f32 0.0, %v2722
  %v2724 = vpop.f32.mrf.mxu0
  %2725 = vmatprep.mubr.f32.mxu0 0.0
  %2726 = vmatmul.mubr.f32.gmra.mxu0 %v2553
  %v2727 = vpop.f32.mrf.mxu0
  %v2728 = vadd.f32 0.0, %v2727
  %v2729 = vpop.f32.mrf.mxu0
  %2730 = vmatprep.mubr.f32.mxu0 0.0
  %2731 = vmatmul.mubr.f32.gmra.mxu0 %v2554
  %v2732 = vpop.f32.mrf.mxu0
  %v2733 = vadd.f32 0.0, %v2732
  %v2734 = vpop.f32.mrf.mxu0
  %2735 = vmatprep.mubr.f32.mxu0 0.0
  %2736 = vmatmul.mubr.f32.gmra.mxu0 %v2555
  %v2737 = vpop.f32.mrf.mxu0
  %v2738 = vadd.f32 0.0, %v2737
  %v2739 = vpop.f32.mrf.mxu0
  %2740 = vmatprep.mubr.f32.mxu0 0.0
  %2741 = vmatmul.mubr.f32.gmra.mxu0 %v2556
  %v2742 = vpop.f32.mrf.mxu0
  %v2743 = vadd.f32 0.0, %v2742
  %v2744 = vpop.f32.mrf.mxu0
  %2745 = vmatprep.mubr.f32.mxu0 0.0
  %2746 = vmatmul.mubr.f32.gmra.mxu0 %v2557
  %v2747 = vpop.f32.mrf.mxu0
  %v2748 = vadd.f32 0.0, %v2747
  %v2749 = vpop.f32.mrf.mxu0
  %2750 = vmatprep.mubr.f32.mxu0 0.0
  %2751 = vmatmul.mubr.f32.gmra.mxu0 %v2558
  %v2752 = vpop.f32.mrf.mxu0
  %v2753 = vadd.f32 0.0, %v2752
  %v2754 = vpop.f32.mrf.mxu0
  %2755 = vmatprep.mubr.f32.mxu0 0.0
  %2756 = vmatmul.mubr.f32.gmra.mxu0 %v2559
  %v2757 = vpop.f32.mrf.mxu0
  %v2758 = vadd.f32 0.0, %v2757
  %v2759 = vpop.f32.mrf.mxu0
  %2760 = vdwg.mxu0
  %v2761 = vmul.f32 %v2683, %v2723
  %v2762 = vmul.f32 %v2688, %v2728
  %v2763 = vmul.f32 %v2693, %v2733
  %v2764 = vmul.f32 %v2698, %v2738
  %v2765 = vmul.f32 %v2703, %v2743
  %v2766 = vmul.f32 %v2708, %v2748
  %v2767 = vmul.f32 %v2713, %v2753
  %v2768 = vmul.f32 %v2718, %v2758
  %v2769 = vmax.f32 %v2761, 1e-16
  %v2770 = vmax.f32 %v2762, 1e-16
  %v2771 = vmax.f32 %v2763, 1e-16
  %v2772 = vmax.f32 %v2764, 1e-16
  %v2773 = vmax.f32 %v2765, 1e-16
  %v2774 = vmax.f32 %v2766, 1e-16
  %v2775 = vmax.f32 %v2767, 1e-16
  %v2776 = vmax.f32 %v2768, 1e-16
  %v2777 = vrsqrt.pop %v2769
  %v2778 = vrsqrt.pop %v2770
  %v2779 = vrsqrt.pop %v2771
  %v2780 = vrsqrt.pop %v2772
  %v2781 = vrsqrt.pop %v2773
  %v2782 = vrsqrt.pop %v2774
  %v2783 = vrsqrt.pop %v2775
  %v2784 = vrsqrt.pop %v2776
  %v2785 = vmul.f32 %v2643, %v2777
  %v2786 = vmul.f32 %v2648, %v2778
  %v2787 = vmul.f32 %v2653, %v2779
  %v2788 = vmul.f32 %v2658, %v2780
  %v2789 = vmul.f32 %v2663, %v2781
  %v2790 = vmul.f32 %v2668, %v2782
  %v2791 = vmul.f32 %v2673, %v2783
  %v2792 = vmul.f32 %v2678, %v2784
  %v2793 = vmul.f32 %v1354, %v2785
  %v2794 = vmul.f32 %v1355, %v2786
  %v2795 = vmul.f32 %v1356, %v2787
  %v2796 = vmul.f32 %v1357, %v2788
  %v2797 = vmul.f32 %v1358, %v2789
  %v2798 = vmul.f32 %v1359, %v2790
  %v2799 = vmul.f32 %v1360, %v2791
  %v2800 = vmul.f32 %v1361, %v2792
  %v2801 = vadd.f32 %v2793, %v2528
  %v2802 = vadd.f32 %v2794, %v2529
  %v2803 = vadd.f32 %v2795, %v2530
  %v2804 = vadd.f32 %v2796, %v2531
  %v2805 = vadd.f32 %v2797, %v2532
  %v2806 = vadd.f32 %v2798, %v2533
  %v2807 = vadd.f32 %v2799, %v2534
  %v2808 = vadd.f32 %v2800, %v2535
  %v2809 = vadd.f32 %v2801, %v2805
  %v2810 = vadd.f32 %v2802, %v2806
  %v2811 = vadd.f32 %v2803, %v2807
  %v2812 = vadd.f32 %v2804, %v2808
  %v2813 = vpack.c.bf16 %v2810, %v2809
  %v2814 = vpack.c.bf16 %v2812, %v2811
  %v2815 = vld [vmem:[%s4] sm:$0xf]
  %v2816 = vld [vmem:[%s4 + $0x4] sm:$0xf]
  %v2817 = vld [vmem:[%s4 + $0x8] sm:$0xf]
  %v2818 = vld [vmem:[%s4 + $0xc] sm:$0xf]
  %v2819 = vld [vmem:[%s4 + $0x10] sm:$0xf]
  %v2820 = vld [vmem:[%s4 + $0x14] sm:$0xf]
  %v2821 = vld [vmem:[%s4 + $0x18] sm:$0xf]
  %v2822 = vld [vmem:[%s4 + $0x1c] sm:$0xf]
  %v2823 = vld [vmem:[%s4 + $0x20] sm:$0xf]
  %v2824 = vld [vmem:[%s4 + $0x24] sm:$0xf]
  %v2825 = vld [vmem:[%s4 + $0x28] sm:$0xf]
  %v2826 = vld [vmem:[%s4 + $0x2c] sm:$0xf]
  %v2827 = vld [vmem:[%s4 + $0x30] sm:$0xf]
  %v2828 = vld [vmem:[%s4 + $0x34] sm:$0xf]
  %v2829 = vld [vmem:[%s4 + $0x38] sm:$0xf]
  %v2830 = vld [vmem:[%s4 + $0x3c] sm:$0xf]
  %v2831 = vld [vmem:[%s5] sm:$0x1]
  %v2833 = vlaneseq
  %v2834 = vshrl.u32 %v2833, 7
  %v2835 = vsub.s32 0, %v2834
  %v2836 = vrot.slane %v2831, %v2835
  %v2854 = vunpack.c.l.b16 %v2815
  %v2855 = vunpack.c.l.b16 %v2816
  %v2856 = vunpack.c.l.b16 %v2817
  %v2857 = vunpack.c.l.b16 %v2818
  %v2858 = vunpack.c.l.b16 %v2819
  %v2859 = vunpack.c.l.b16 %v2820
  %v2860 = vunpack.c.l.b16 %v2821
  %v2861 = vunpack.c.l.b16 %v2822
  %v2862 = vunpack.c.l.b16 %v2823
  %v2863 = vunpack.c.l.b16 %v2824
  %v2864 = vunpack.c.l.b16 %v2825
  %v2865 = vunpack.c.l.b16 %v2826
  %v2866 = vunpack.c.l.b16 %v2827
  %v2867 = vunpack.c.l.b16 %v2828
  %v2868 = vunpack.c.l.b16 %v2829
  %v2869 = vunpack.c.l.b16 %v2830
  %v2870 = vpack.c.b16 %v2855, %v2854
  %v2871 = vpack.c.b16 %v2857, %v2856
  %v2872 = vpack.c.b16 %v2859, %v2858
  %v2873 = vpack.c.b16 %v2861, %v2860
  %v2874 = vpack.c.b16 %v2863, %v2862
  %v2875 = vpack.c.b16 %v2865, %v2864
  %v2876 = vpack.c.b16 %v2867, %v2866
  %v2877 = vpack.c.b16 %v2869, %v2868
  %2886 = vmatprep.subr.bf16.mxu0 0
  %2887 = vmatpush1.bf16.msra.mxu0 %v2877
  %2888 = vmatprep.subr.bf16.mxu0 0
  %2889 = vmatpush1.bf16.msra.mxu0 %v2876
  %2890 = vmatprep.subr.bf16.mxu0 0
  %2891 = vmatpush1.bf16.msra.mxu0 %v2875
  %2892 = vmatprep.subr.bf16.mxu0 0
  %2893 = vmatpush1.bf16.msra.mxu0 %v2874
  %2894 = vmatprep.subr.bf16.mxu0 0
  %2895 = vmatpush1.bf16.msra.mxu0 %v2873
  %2896 = vmatprep.subr.bf16.mxu0 0
  %2897 = vmatpush1.bf16.msra.mxu0 %v2872
  %2898 = vmatprep.subr.bf16.mxu0 0
  %2899 = vmatpush1.bf16.msra.mxu0 %v2871
  %2900 = vmatprep.subr.bf16.mxu0 0
  %2901 = vmatpush1.bf16.msra.mxu0 %v2870
  %2902 = vmatprep.subr.bf16.mxu0 0
  %2903 = vmatpush2.bf16.msra.mxu0 0
  %2904 = vmatprep.subr.bf16.mxu0 0
  %2905 = vmatpush2.bf16.msra.mxu0 0
  %2906 = vmatprep.subr.bf16.mxu0 0
  %2907 = vmatpush2.bf16.msra.mxu0 0
  %2908 = vmatprep.subr.bf16.mxu0 0
  %2909 = vmatpush2.bf16.msra.mxu0 0
  %2910 = vmatprep.subr.bf16.mxu0 0
  %2911 = vmatpush2.bf16.msra.mxu0 0
  %2912 = vmatprep.subr.bf16.mxu0 0
  %2913 = vmatpush2.bf16.msra.mxu0 0
  %2914 = vmatprep.subr.bf16.mxu0 0
  %2915 = vmatpush2.bf16.msra.mxu0 0
  %2916 = vmatprep.subr.bf16.mxu0 0
  %2917 = vmatpush2.bf16.msra.mxu0 0
  %2918 = vmatprep.mubr.bf16.mxu0 0
  %2919 = vmatmul.mubr.bf16.gmra.mxu0 %v2813
  %v2920 = vpop.f32.mrf.mxu0
  %v2921 = vadd.f32 %v2836, %v2920
  %v2922 = vpop.f32.mrf.mxu0
  %v2923 = vpop.f32.mrf.mxu0
  %v2924 = vadd.f32 %v2836, %v2923
  %v2925 = vpop.f32.mrf.mxu0
  %2926 = vmatprep.mubr.bf16.mxu0 0
  %2927 = vmatmul.mubr.bf16.gmra.mxu0 %v2814
  %v2928 = vpop.f32.mrf.mxu0
  %v2929 = vadd.f32 %v2836, %v2928
  %v2930 = vpop.f32.mrf.mxu0
  %v2931 = vpop.f32.mrf.mxu0
  %v2932 = vadd.f32 %v2836, %v2931
  %v2933 = vpop.f32.mrf.mxu0
  %2934 = vdwg.mxu0
  %2935 = vst [vmem:[%s6] sm:$0xff] %v2921
  %2936 = vst [vmem:[%s6 + $0x8] sm:$0xff] %v2924
  %2937 = vst [vmem:[%s6 + $0x10] sm:$0xff] %v2929
  %2938 = vst [vmem:[%s6 + $0x18] sm:$0xff] %v2932
  // Predicated region
  $region26: #{unifie_forward.1} parent=0 // pred_check
    _
  $region27: #{unifie_forward.1} parent=0 // pred_check_branch
    %2940 = sbr.rel (0) target = $region29
  $region28: #{unifie_forward.1} parent=0 // pred_region
    _
  $region29: #{unifie_forward.1} parent=0 // pred_fallthru
    _
  // Predicated region
  $region30: #{unifie_forward.1} parent=0 // pred_check
    _
  $region31: #{unifie_forward.1} parent=0 // pred_check_branch
    %2942 = sbr.rel (0) target = $region33
  $region32: #{unifie_forward.1} parent=0 // pred_region
    _
  $region33: #{unifie_forward.1} parent=0 // pred_fallthru
    _

</llo_original>
